<compile_context>
chip_gen: v7x
topology: tpu7x:2x2x1
jax: 0.10.0
libtpu: 0.0.40
codegen_flags: <defaults>
</compile_context>

<pallas_src>
import functools

import jax
import jax.numpy as jnp
from jax import lax
from jax.experimental import pallas as pl
from jax.experimental.pallas import tpu as pltpu

_SUB = 8  # sublane block: timesteps per scan chunk


def _hawk_kernel(x_ref, w_in_ref, w_conv_ref, b_conv_ref, w_gates_ref,
                 b_gates_ref, neg_scale_ref, w_out_ref, out_ref,
                 xi_pad_s, a_s, h_s, gg_s, h_carry_s,
                 *, K, Tt, E, use_roll_scan):
    f32 = jnp.float32
    bf16 = jnp.bfloat16
    t_idx = pl.program_id(1)

    # ---- reset cross-tile carries at the first T tile of every batch element ----
    @pl.when(t_idx == 0)
    def _():
        h_carry_s[...] = jnp.zeros_like(h_carry_s)
        if K > 1:
            xi_pad_s[pl.ds(_SUB - (K - 1), K - 1), :] = jnp.zeros((K - 1, E), f32)

    # ---- fused input projection: one (C, 2E) GEMM, bf16 operands, f32 accum ----
    x_bf = x_ref[0].astype(bf16)                                       # (Tt, C)
    proj = jnp.dot(x_bf, w_in_ref[...], preferred_element_type=f32)    # (Tt, 2E)
    gate = proj[:, :E]
    xi = proj[:, E:]

    # gelu(gate) immediately -> bf16 scratch (short f32 live range; feeds out GEMM).
    # TODO(synk): PyTorch F.gelu defaults to the exact erf gelu; the tanh
    # approximation is used here for portable Mosaic lowering (max diff ~1e-3).
    gg_s[...] = jax.nn.gelu(gate, approximate=True).astype(bf16)

    # ---- causal depthwise conv1d (kernel K, padding K-1, cropped to Tt) ----
    # xi_pad rows [8-(K-1), 8) hold the previous tile's last K-1 xi rows (zeros at
    # t_idx == 0); rows [8, 8+Tt) hold the current tile.  Taps read static shifted
    # slices of the scratch (sublane-shifted vld, no concatenate copies).
    xi_pad_s[pl.ds(_SUB, Tt), :] = xi
    conv = xi * w_conv_ref[K - 1:K, :].astype(f32) + b_conv_ref[...].astype(f32)
    for j in range(K - 1):
        start = _SUB - (K - 1) + j
        conv = conv + (w_conv_ref[j:j + 1, :].astype(f32)
                       * xi_pad_s[pl.ds(start, Tt), :])
    if K > 1:
        # stash this tile's last K-1 xi rows for the next T tile (after the reads)
        xi_pad_s[pl.ds(_SUB - (K - 1), K - 1), :] = xi[Tt - (K - 1):, :]

    # ---- fused gate projection: one (E, 2E) GEMM, bf16 operands, f32 accum ----
    gates = (jnp.dot(conv.astype(bf16), w_gates_ref[...],
                     preferred_element_type=f32)
             + b_gates_ref[...].astype(f32))                           # (Tt, 2E)
    forget = gates[:, :E]
    inp = gates[:, E:]

    # neg_scale = -exp(alpha_log_scale) * softplus(forget_base)   (precomputed)
    alpha = jnp.exp(neg_scale_ref[...].astype(f32) * jax.nn.sigmoid(forget))
    beta = jnp.sqrt(1.0 - alpha * alpha + 1e-6)
    xs = beta * jax.nn.sigmoid(inp) * conv

    a_s[...] = alpha
    h_s[...] = xs          # overwritten in place with h during the scan

    # ---- linear recurrence h_t = alpha_t*h_{t-1} + xs_t, blocked by 8 sublanes ----
    n_chunks = Tt // _SUB
    row = lax.broadcasted_iota(jnp.int32, (_SUB, E), 0)

    def chunk(c, carry):
        start = pl.multiple_of(c * _SUB, _SUB)
        a = a_s[pl.ds(start, _SUB), :]
        xv = h_s[pl.ds(start, _SUB), :]
        if use_roll_scan:
            # Hillis-Steele inclusive scan of (a, x): 3 log-steps on the XLU.
            for d in (1, 2, 4):
                x_sh = pltpu.roll(xv, d, axis=0)
                a_sh = pltpu.roll(a, d, axis=0)
                m = row >= d
                xv = jnp.where(m, a * x_sh + xv, xv)
                a = jnp.where(m, a_sh * a, a)
            blk = a * carry + xv
            new_carry = blk[_SUB - 1:_SUB, :]
        else:
            # safe alternative: 8-deep in-register unroll (still aligned 8-row I/O)
            rows = []
            h = carry
            for t in range(_SUB):
                h = a[t:t + 1, :] * h + xv[t:t + 1, :]
                rows.append(h)
            blk = jnp.concatenate(rows, axis=0)
            new_carry = h
        h_s[pl.ds(start, _SUB), :] = blk
        return new_carry

    carry = lax.fori_loop(0, n_chunks, chunk, h_carry_s[...],
                          unroll=True if n_chunks <= 8 else 2)
    h_carry_s[...] = carry

    # ---- output projection: (gelu(gate) * h) @ W_out, bf16 operands ----
    g = (gg_s[...].astype(f32) * h_s[...]).astype(bf16)
    out_ref[0] = jnp.dot(g, w_out_ref[...],
                         preferred_element_type=f32).astype(out_ref.dtype)


def hawk_forward(x, params, *, t_tile=256, use_roll_scan=True,
                 single_buffer_weights=True):
    """Fused Hawk forward: one pallas_call, grid = (batch, T tiles)."""
    B, T, C = x.shape
    E = params["w_in"].shape[1] // 2
    K = params["w_conv"].shape[0]

    # T tile: a multiple of the 8-sublane scan block; pad T to a whole number of
    # tiles (the block is causal, so padded tail rows never affect rows < T).
    Tt = max(_SUB, (min(t_tile, T) // _SUB) * _SUB)
    T_pad = ((T + Tt - 1) // Tt) * Tt
    x_in = x if T_pad == T else jnp.pad(x, ((0, 0), (0, T_pad - T), (0, 0)))
    n_t = T_pad // Tt

    kernel = functools.partial(_hawk_kernel, K=K, Tt=Tt, E=E,
                               use_roll_scan=use_roll_scan)

    def wspec(shape):
        nd = len(shape)
        if single_buffer_weights:
            return pl.BlockSpec(shape, lambda b, t: (0,) * nd,
                                pipeline_mode=pl.Buffered(1))
        return pl.BlockSpec(shape, lambda b, t: (0,) * nd)

    def _nbytes(shape, dtype):
        n = 1
        for d in shape:
            n *= int(d)
        return n * jnp.dtype(dtype).itemsize

    weight_bytes = sum(_nbytes(v.shape, v.dtype) for v in params.values())
    io_tile = _nbytes((1, Tt, C), x.dtype)
    scratch_bytes = (_nbytes((_SUB + Tt, E), jnp.float32)
                     + 2 * _nbytes((Tt, E), jnp.float32)
                     + _nbytes((Tt, E), jnp.bfloat16)
                     + _nbytes((1, E), jnp.float32))
    wbuf = 1 if single_buffer_weights else 2
    need = 4 * io_tile + wbuf * weight_bytes + scratch_bytes
    # computed from actual buffers; >32 MiB allowed for big tiles on v5e/v6e while
    # staying honest on v7x's 64 MiB per-TC VMEM.
    vmem_limit = int(min(max(2 * need + (8 << 20), 32 << 20), 96 << 20))

    flops = int(2 * B * T_pad * (2 * C * E + 2 * E * E + E * C)
                + 30 * B * T_pad * E)
    transcendentals = int(5 * B * T_pad * E)
    bytes_accessed = int(2 * B * T_pad * C * x.dtype.itemsize + weight_bytes)

    out = pl.pallas_call(
        kernel,
        out_shape=jax.ShapeDtypeStruct((B, T_pad, C), x.dtype),
        grid_spec=pltpu.PrefetchScalarGridSpec(
            num_scalar_prefetch=0,
            grid=(B, n_t),
            in_specs=[
                pl.BlockSpec((1, Tt, C), lambda b, t: (b, t, 0)),   # x
                wspec((C, 2 * E)),                                  # w_in   (bf16)
                wspec((K, E)),                                      # w_conv (f32)
                wspec((1, E)),                                      # b_conv
                wspec((E, 2 * E)),                                  # w_gates (bf16)
                wspec((1, 2 * E)),                                  # b_gates
                wspec((1, E)),                                      # neg_scale
                wspec((E, C)),                                      # w_out  (bf16)
            ],
            out_specs=pl.BlockSpec((1, Tt, C), lambda b, t: (b, t, 0)),
            scratch_shapes=[
                pltpu.VMEM((_SUB + Tt, E), jnp.float32),  # xi tile + conv-tail carry
                pltpu.VMEM((Tt, E), jnp.float32),         # alpha
                pltpu.VMEM((Tt, E), jnp.float32),         # xs -> h (in place)
                pltpu.VMEM((Tt, E), jnp.bfloat16),        # gelu(gate)
                pltpu.VMEM((1, E), jnp.float32),          # hidden-state carry
            ],
        ),
        compiler_params=pltpu.CompilerParams(
            dimension_semantics=("parallel", "arbitrary"),
            vmem_limit_bytes=vmem_limit,
        ),
        cost_estimate=pl.CostEstimate(
            flops=flops, transcendentals=transcendentals,
            bytes_accessed=bytes_accessed),
    )(x_in, params["w_in"], params["w_conv"], params["b_conv"],
      params["w_gates"], params["b_gates"], params["neg_scale"],
      params["w_out"])

    return out if T_pad == T else out[:, :T, :]


def init_params(key, dim, kernel_size=4):
    """Mirror of the PyTorch parameter set, repacked to kernel-friendly layout."""
    E = dim
    ks = jax.random.split(key, 6)
    w_input = jax.random.normal(ks[0], (2 * E, dim), jnp.float32) * dim ** -0.5
    w_gates = jax.random.normal(ks[1], (2 * E, E), jnp.float32) * E ** -0.5
    b_gates = jax.random.normal(ks[2], (2 * E,), jnp.float32) * 0.05
    w_output = jax.random.normal(ks[3], (dim, E), jnp.float32) * E ** -0.5
    w_conv = jax.random.normal(ks[4], (E, 1, kernel_size), jnp.float32) * 0.3
    b_conv = jax.random.normal(ks[5], (E,), jnp.float32) * 0.1
    forget_base = jnp.linspace(-4.323, -9.0, E, dtype=jnp.float32)
    alpha_log_scale = jnp.log(jnp.float32(8.0))
    neg_scale = -jnp.exp(alpha_log_scale) * jax.nn.softplus(forget_base)

    return dict(
        # MXU weights stored bf16 (halved DMA + VMEM, f32 accumulation in-kernel).
        w_in=jnp.transpose(w_input).astype(jnp.bfloat16),     # (C, 2E) [:, :E]=gate
        w_conv=jnp.transpose(w_conv[:, 0, :]),                 # (K, E)  f32 (VPU)
        b_conv=b_conv.reshape(1, E),
        w_gates=jnp.transpose(w_gates).astype(jnp.bfloat16),   # (E, 2E) [:, :E]=forget
        b_gates=b_gates.reshape(1, 2 * E),
        neg_scale=neg_scale.reshape(1, E),
        w_out=jnp.transpose(w_output).astype(jnp.bfloat16),    # (E, C)
    )


def _reference(x, params, K):
    """Pure-JAX reference mirroring the kernel's precision policy
    (bf16 MXU operands, f32 accumulation, f32 elementwise)."""
    f32, bf16 = jnp.float32, jnp.bfloat16
    x = x.astype(f32)
    proj = jnp.einsum("btc,ce->bte", x.astype(bf16), params["w_in"],
                      preferred_element_type=f32)
    E = proj.shape[-1] // 2
    gate, xi = proj[..., :E], proj[..., E:]
    B, T, _ = xi.shape

    xpad = jnp.pad(xi, ((0, 0), (K - 1, 0), (0, 0)))
    conv = jnp.zeros((B, T, E), f32) + params["b_conv"][0]
    for j in range(K):
        conv = conv + params["w_conv"][j] * xpad[:, j:j + T, :]

    gates = jnp.einsum("bte,ef->btf", conv.astype(bf16), params["w_gates"],
                       preferred_element_type=f32) + params["b_gates"][0]
    forget, inp = gates[..., :E], gates[..., E:]

    alpha = jnp.exp(params["neg_scale"][0] * jax.nn.sigmoid(forget))
    beta = jnp.sqrt(1.0 - alpha * alpha + 1e-6)
    xs = beta * jax.nn.sigmoid(inp) * conv

    def step(h, a_x):
        a, xv = a_x
        h = a * h + xv
        return h, h

    _, hs = jax.lax.scan(step, jnp.zeros((B, E), f32),
                         (jnp.swapaxes(alpha, 0, 1), jnp.swapaxes(xs, 0, 1)))
    h = jnp.swapaxes(hs, 0, 1)

    gg = jax.nn.gelu(gate, approximate=True).astype(bf16).astype(f32)
    g = (gg * h).astype(bf16)
    return jnp.einsum("bte,ec->btc", g, params["w_out"],
                      preferred_element_type=f32)


if __name__ == "__main__":
    B, T, dim = 2, 16, 32
    kernel_size = 4

    key = jax.random.PRNGKey(0)
    kx, kp = jax.random.split(key)
    x = jax.random.normal(kx, (B, T, dim), dtype=jnp.float32)
    params = init_params(kp, dim, kernel_size)

    try:
        out = jax.block_until_ready(jax.jit(hawk_forward)(x, params))
    except Exception:
        # Conservative fallback: 8-deep in-register unrolled scan chunks and
        # default (double-buffered) weight pipelining.
        fwd = functools.partial(hawk_forward, use_roll_scan=False,
                                single_buffer_weights=False)
        out = jax.block_until_ready(jax.jit(fwd)(x, params))

    ref = _reference(x, params, kernel_size)
    assert out.shape == (B, T, dim)
    err = float(jnp.max(jnp.abs(out - ref)))
    assert jnp.allclose(out, ref, atol=2e-3, rtol=2e-3), f"max abs err {err}"

    print("KERNEL_OK")
</pallas_src>

<mosaic_0001>
module attributes {stable_mosaic.version = 11 : i64} {
  func.func @_hawk_kernel(%arg0: i32, %arg1: i32, %arg2: memref<1x16x32xf32, #tpu.memory_space<vmem>>, %arg3: memref<32x64xbf16, #tpu.memory_space<vmem>>, %arg4: memref<4x32xf32, #tpu.memory_space<vmem>>, %arg5: memref<1x32xf32, #tpu.memory_space<vmem>>, %arg6: memref<32x64xbf16, #tpu.memory_space<vmem>>, %arg7: memref<1x64xf32, #tpu.memory_space<vmem>>, %arg8: memref<1x32xf32, #tpu.memory_space<vmem>>, %arg9: memref<32x32xbf16, #tpu.memory_space<vmem>>, %arg10: memref<1x16x32xf32, #tpu.memory_space<vmem>>, %arg11: memref<24x32xf32, #tpu.memory_space<vmem>>, %arg12: memref<16x32xf32, #tpu.memory_space<vmem>>, %arg13: memref<16x32xf32, #tpu.memory_space<vmem>>, %arg14: memref<16x32xbf16, #tpu.memory_space<vmem>>, %arg15: memref<1x32xf32, #tpu.memory_space<vmem>>) attributes {dimension_semantics = [#tpu.dimension_semantics<parallel>, #tpu.dimension_semantics<arbitrary>], iteration_bounds = array<i64: 2, 1>, scalar_prefetch = 0 : i64, scratch_operands = 5 : i64, tpu.core_type = #tpu.core_type<tc>, window_params = [{transform_indices = @transform_0, window_bounds = array<i64: 1, 16, 32>}, {pipeline_mode = #tpu.pipeline_mode<synchronous>, transform_indices = @transform_1, window_bounds = array<i64: 32, 64>}, {pipeline_mode = #tpu.pipeline_mode<synchronous>, transform_indices = @transform_2, window_bounds = array<i64: 4, 32>}, {pipeline_mode = #tpu.pipeline_mode<synchronous>, transform_indices = @transform_3, window_bounds = array<i64: 1, 32>}, {pipeline_mode = #tpu.pipeline_mode<synchronous>, transform_indices = @transform_4, window_bounds = array<i64: 32, 64>}, {pipeline_mode = #tpu.pipeline_mode<synchronous>, transform_indices = @transform_5, window_bounds = array<i64: 1, 64>}, {pipeline_mode = #tpu.pipeline_mode<synchronous>, transform_indices = @transform_6, window_bounds = array<i64: 1, 32>}, {pipeline_mode = #tpu.pipeline_mode<synchronous>, transform_indices = @transform_7, window_bounds = array<i64: 32, 32>}, {transform_indices = @transform_8, window_bounds = array<i64: 1, 16, 32>}]} {
    %c0_i32 = arith.constant 0 : i32
    %0 = arith.cmpi eq, %arg1, %c0_i32 : i32
    %1 = arith.extui %0 : i1 to i32
    %c0_i32_0 = arith.constant 0 : i32
    %2 = arith.cmpi ne, %1, %c0_i32_0 : i32
    scf.if %2 {
      %cst_78 = arith.constant 0.000000e+00 : f32
      %172 = vector.broadcast %cst_78 : f32 to vector<1x32xf32>
      %c0_79 = arith.constant 0 : index
      %c0_80 = arith.constant 0 : index
      %173 = vector.load %arg15[%c0_79, %c0_80] : memref<1x32xf32, #tpu.memory_space<vmem>>, vector<1x32xf32>
      tpu.vector_store %arg15[%c0_79, %c0_80], %172 {strides = array<i32>} : memref<1x32xf32, #tpu.memory_space<vmem>>, vector<1x32xf32>,
      %cst_81 = arith.constant 0.000000e+00 : f32
      %174 = vector.broadcast %cst_81 : f32 to vector<3x32xf32>
      %c5_82 = arith.constant 5 : index
      %c0_83 = arith.constant 0 : index
      %175 = vector.load %arg11[%c5_82, %c0_83] : memref<24x32xf32, #tpu.memory_space<vmem>>, vector<3x32xf32>
      tpu.vector_store %arg11[%c5_82, %c0_83], %174 {strides = array<i32>} : memref<24x32xf32, #tpu.memory_space<vmem>>, vector<3x32xf32>,
    } else {
    }
    %c0 = arith.constant 0 : index
    %c0_1 = arith.constant 0 : index
    %c0_2 = arith.constant 0 : index
    %3 = vector.load %arg2[%c0, %c0_1, %c0_2] : memref<1x16x32xf32, #tpu.memory_space<vmem>>, vector<1x16x32xf32>
    %4 = vector.shape_cast %3 : vector<1x16x32xf32> to vector<16x32xf32>
    %5 = arith.truncf %4 : vector<16x32xf32> to vector<16x32xbf16>
    %c0_3 = arith.constant 0 : index
    %c0_4 = arith.constant 0 : index
    %6 = vector.load %arg3[%c0_3, %c0_4] : memref<32x64xbf16, #tpu.memory_space<vmem>>, vector<32x64xbf16>
    %cst = arith.constant dense<0.000000e+00> : vector<16x64xf32>
    %7 = tpu.matmul %5, %6, %cst {dimension_numbers = #tpu.dot_dimension_numbers<[1], [0], [0], [1], [0, 0, 1, 1], [], []>} : vector<16x32xbf16>, vector<32x64xbf16>, vector<16x64xf32> -> vector<16x64xf32>
    %8 = vector.extract_strided_slice %7 {offsets = [0, 0], sizes = [16, 32], strides = [1, 1]} : vector<16x64xf32> to vector<16x32xf32>
    %9 = vector.extract_strided_slice %7 {offsets = [0, 32], sizes = [16, 32], strides = [1, 1]} : vector<16x64xf32> to vector<16x32xf32>
    %10 = arith.mulf %8, %8 : vector<16x32xf32>
    %11 = arith.mulf %8, %10 : vector<16x32xf32>
    %cst_5 = arith.constant 4.471500e-02 : f32
    %12 = vector.broadcast %cst_5 : f32 to vector<16x32xf32>
    %13 = arith.mulf %12, %11 : vector<16x32xf32>
    %14 = arith.addf %8, %13 : vector<16x32xf32>
    %cst_6 = arith.constant 0.797884583 : f32
    %15 = vector.broadcast %cst_6 : f32 to vector<16x32xf32>
    %16 = arith.mulf %15, %14 : vector<16x32xf32>
    %17 = math.tanh %16 : vector<16x32xf32>
    %cst_7 = arith.constant 1.000000e+00 : f32
    %18 = vector.broadcast %cst_7 : f32 to vector<16x32xf32>
    %19 = arith.addf %18, %17 : vector<16x32xf32>
    %cst_8 = arith.constant 5.000000e-01 : f32
    %20 = vector.broadcast %cst_8 : f32 to vector<16x32xf32>
    %21 = arith.mulf %20, %19 : vector<16x32xf32>
    %22 = arith.mulf %8, %21 : vector<16x32xf32>
    %23 = arith.truncf %22 : vector<16x32xf32> to vector<16x32xbf16>
    %c0_9 = arith.constant 0 : index
    %c0_10 = arith.constant 0 : index
    %24 = vector.load %arg14[%c0_9, %c0_10] : memref<16x32xbf16, #tpu.memory_space<vmem>>, vector<16x32xbf16>
    tpu.vector_store %arg14[%c0_9, %c0_10], %23 {strides = array<i32>} : memref<16x32xbf16, #tpu.memory_space<vmem>>, vector<16x32xbf16>,
    %c8 = arith.constant 8 : index
    %c0_11 = arith.constant 0 : index
    %25 = vector.load %arg11[%c8, %c0_11] : memref<24x32xf32, #tpu.memory_space<vmem>>, vector<16x32xf32>
    tpu.vector_store %arg11[%c8, %c0_11], %9 {strides = array<i32>} : memref<24x32xf32, #tpu.memory_space<vmem>>, vector<16x32xf32>,
    %c3 = arith.constant 3 : index
    %c0_12 = arith.constant 0 : index
    %26 = vector.load %arg4[%c3, %c0_12] : memref<4x32xf32, #tpu.memory_space<vmem>>, vector<1x32xf32>
    %27 = vector.broadcast %26 : vector<1x32xf32> to vector<16x32xf32>
    %28 = arith.mulf %9, %27 : vector<16x32xf32>
    %c0_13 = arith.constant 0 : index
    %c0_14 = arith.constant 0 : index
    %29 = vector.load %arg5[%c0_13, %c0_14] : memref<1x32xf32, #tpu.memory_space<vmem>>, vector<1x32xf32>
    %30 = vector.broadcast %29 : vector<1x32xf32> to vector<16x32xf32>
    %31 = arith.addf %28, %30 : vector<16x32xf32>
    %c0_15 = arith.constant 0 : index
    %c0_16 = arith.constant 0 : index
    %32 = vector.load %arg4[%c0_15, %c0_16] : memref<4x32xf32, #tpu.memory_space<vmem>>, vector<1x32xf32>
    %c5 = arith.constant 5 : index
    %c0_17 = arith.constant 0 : index
    %33 = vector.load %arg11[%c5, %c0_17] : memref<24x32xf32, #tpu.memory_space<vmem>>, vector<16x32xf32>
    %34 = vector.broadcast %32 : vector<1x32xf32> to vector<16x32xf32>
    %35 = arith.mulf %34, %33 : vector<16x32xf32>
    %36 = arith.addf %31, %35 : vector<16x32xf32>
    %c1 = arith.constant 1 : index
    %c0_18 = arith.constant 0 : index
    %37 = vector.load %arg4[%c1, %c0_18] : memref<4x32xf32, #tpu.memory_space<vmem>>, vector<1x32xf32>
    %c6 = arith.constant 6 : index
    %c0_19 = arith.constant 0 : index
    %38 = vector.load %arg11[%c6, %c0_19] : memref<24x32xf32, #tpu.memory_space<vmem>>, vector<16x32xf32>
    %39 = vector.broadcast %37 : vector<1x32xf32> to vector<16x32xf32>
    %40 = arith.mulf %39, %38 : vector<16x32xf32>
    %41 = arith.addf %36, %40 : vector<16x32xf32>
    %c2 = arith.constant 2 : index
    %c0_20 = arith.constant 0 : index
    %42 = vector.load %arg4[%c2, %c0_20] : memref<4x32xf32, #tpu.memory_space<vmem>>, vector<1x32xf32>
    %c7 = arith.constant 7 : index
    %c0_21 = arith.constant 0 : index
    %43 = vector.load %arg11[%c7, %c0_21] : memref<24x32xf32, #tpu.memory_space<vmem>>, vector<16x32xf32>
    %44 = vector.broadcast %42 : vector<1x32xf32> to vector<16x32xf32>
    %45 = arith.mulf %44, %43 : vector<16x32xf32>
    %46 = arith.addf %41, %45 : vector<16x32xf32>
    %47 = vector.extract_strided_slice %9 {offsets = [13, 0], sizes = [3, 32], strides = [1, 1]} : vector<16x32xf32> to vector<3x32xf32>
    %c5_22 = arith.constant 5 : index
    %c0_23 = arith.constant 0 : index
    %48 = vector.load %arg11[%c5_22, %c0_23] : memref<24x32xf32, #tpu.memory_space<vmem>>, vector<3x32xf32>
    tpu.vector_store %arg11[%c5_22, %c0_23], %47 {strides = array<i32>} : memref<24x32xf32, #tpu.memory_space<vmem>>, vector<3x32xf32>,
    %49 = arith.truncf %46 : vector<16x32xf32> to vector<16x32xbf16>
    %c0_24 = arith.constant 0 : index
    %c0_25 = arith.constant 0 : index
    %50 = vector.load %arg6[%c0_24, %c0_25] : memref<32x64xbf16, #tpu.memory_space<vmem>>, vector<32x64xbf16>
    %cst_26 = arith.constant dense<0.000000e+00> : vector<16x64xf32>
    %51 = tpu.matmul %49, %50, %cst_26 {dimension_numbers = #tpu.dot_dimension_numbers<[1], [0], [0], [1], [0, 0, 1, 1], [], []>} : vector<16x32xbf16>, vector<32x64xbf16>, vector<16x64xf32> -> vector<16x64xf32>
    %c0_27 = arith.constant 0 : index
    %c0_28 = arith.constant 0 : index
    %52 = vector.load %arg7[%c0_27, %c0_28] : memref<1x64xf32, #tpu.memory_space<vmem>>, vector<1x64xf32>
    %53 = vector.broadcast %52 : vector<1x64xf32> to vector<16x64xf32>
    %54 = arith.addf %51, %53 : vector<16x64xf32>
    %55 = vector.extract_strided_slice %54 {offsets = [0, 0], sizes = [16, 32], strides = [1, 1]} : vector<16x64xf32> to vector<16x32xf32>
    %56 = vector.extract_strided_slice %54 {offsets = [0, 32], sizes = [16, 32], strides = [1, 1]} : vector<16x64xf32> to vector<16x32xf32>
    %c0_29 = arith.constant 0 : index
    %c0_30 = arith.constant 0 : index
    %57 = vector.load %arg8[%c0_29, %c0_30] : memref<1x32xf32, #tpu.memory_space<vmem>>, vector<1x32xf32>
    %58 = arith.negf %55 : vector<16x32xf32>
    %59 = math.exp %58 : vector<16x32xf32>
    %cst_31 = arith.constant 1.000000e+00 : f32
    %60 = vector.broadcast %cst_31 : f32 to vector<16x32xf32>
    %61 = arith.addf %60, %59 : vector<16x32xf32>
    %62 = arith.divf %60, %61 : vector<16x32xf32>
    %63 = vector.broadcast %57 : vector<1x32xf32> to vector<16x32xf32>
    %64 = arith.mulf %63, %62 : vector<16x32xf32>
    %65 = math.exp %64 : vector<16x32xf32>
    %66 = arith.mulf %65, %65 : vector<16x32xf32>
    %cst_32 = arith.constant 1.000000e+00 : f32
    %67 = vector.broadcast %cst_32 : f32 to vector<16x32xf32>
    %68 = arith.subf %67, %66 : vector<16x32xf32>
    %cst_33 = arith.constant 9.99999997E-7 : f32
    %69 = vector.broadcast %cst_33 : f32 to vector<16x32xf32>
    %70 = arith.addf %68, %69 : vector<16x32xf32>
    %71 = math.sqrt %70 : vector<16x32xf32>
    %72 = arith.negf %56 : vector<16x32xf32>
    %73 = math.exp %72 : vector<16x32xf32>
    %cst_34 = arith.constant 1.000000e+00 : f32
    %74 = vector.broadcast %cst_34 : f32 to vector<16x32xf32>
    %75 = arith.addf %74, %73 : vector<16x32xf32>
    %76 = arith.divf %74, %75 : vector<16x32xf32>
    %77 = arith.mulf %71, %76 : vector<16x32xf32>
    %78 = arith.mulf %77, %46 : vector<16x32xf32>
    %c0_35 = arith.constant 0 : index
    %c0_36 = arith.constant 0 : index
    %79 = vector.load %arg12[%c0_35, %c0_36] : memref<16x32xf32, #tpu.memory_space<vmem>>, vector<16x32xf32>
    tpu.vector_store %arg12[%c0_35, %c0_36], %65 {strides = array<i32>} : memref<16x32xf32, #tpu.memory_space<vmem>>, vector<16x32xf32>,
    %c0_37 = arith.constant 0 : index
    %c0_38 = arith.constant 0 : index
    %80 = vector.load %arg13[%c0_37, %c0_38] : memref<16x32xf32, #tpu.memory_space<vmem>>, vector<16x32xf32>
    tpu.vector_store %arg13[%c0_37, %c0_38], %78 {strides = array<i32>} : memref<16x32xf32, #tpu.memory_space<vmem>>, vector<16x32xf32>,
    %81 = tpu.iota {dimensions = array<i32: 0>} : vector<8x32xi32>
    %c0_39 = arith.constant 0 : index
    %c0_40 = arith.constant 0 : index
    %82 = vector.load %arg15[%c0_39, %c0_40] : memref<1x32xf32, #tpu.memory_space<vmem>>, vector<1x32xf32>
    %c0_i32_41 = arith.constant 0 : i32
    %c8_i32 = arith.constant 8 : i32
    %83 = arith.muli %c0_i32_41, %c8_i32 : i32
    %84 = tpu.assume_multiple %83, 8 : i32
    %85 = arith.index_cast %84 : i32 to index
    %c0_42 = arith.constant 0 : index
    %86 = vector.load %arg12[%85, %c0_42] : memref<16x32xf32, #tpu.memory_space<vmem>>, vector<8x32xf32>
    %87 = arith.index_cast %84 : i32 to index
    %c0_43 = arith.constant 0 : index
    %88 = vector.load %arg13[%87, %c0_43] : memref<16x32xf32, #tpu.memory_space<vmem>>, vector<8x32xf32>
    %c1_i32 = arith.constant 1 : i32
    %89 = tpu.dynamic_rotate %88 by %c1_i32 dim 0 : vector<8x32xf32>, i32 -> vector<8x32xf32>
    %c1_i32_44 = arith.constant 1 : i32
    %90 = tpu.dynamic_rotate %86 by %c1_i32_44 dim 0 : vector<8x32xf32>, i32 -> vector<8x32xf32>
    %c1_i32_45 = arith.constant 1 : i32
    %91 = vector.broadcast %c1_i32_45 : i32 to vector<8x32xi32>
    %92 = arith.cmpi sge, %81, %91 : vector<8x32xi32>
    %93 = arith.mulf %86, %89 : vector<8x32xf32>
    %94 = arith.addf %93, %88 : vector<8x32xf32>
    %95 = arith.select %92, %94, %88 : vector<8x32xi1>, vector<8x32xf32>
    %96 = arith.mulf %90, %86 : vector<8x32xf32>
    %97 = arith.select %92, %96, %86 : vector<8x32xi1>, vector<8x32xf32>
    %c2_i32 = arith.constant 2 : i32
    %98 = tpu.dynamic_rotate %95 by %c2_i32 dim 0 : vector<8x32xf32>, i32 -> vector<8x32xf32>
    %c2_i32_46 = arith.constant 2 : i32
    %99 = tpu.dynamic_rotate %97 by %c2_i32_46 dim 0 : vector<8x32xf32>, i32 -> vector<8x32xf32>
    %c2_i32_47 = arith.constant 2 : i32
    %100 = vector.broadcast %c2_i32_47 : i32 to vector<8x32xi32>
    %101 = arith.cmpi sge, %81, %100 : vector<8x32xi32>
    %102 = arith.mulf %97, %98 : vector<8x32xf32>
    %103 = arith.addf %102, %95 : vector<8x32xf32>
    %104 = arith.select %101, %103, %95 : vector<8x32xi1>, vector<8x32xf32>
    %105 = arith.mulf %99, %97 : vector<8x32xf32>
    %106 = arith.select %101, %105, %97 : vector<8x32xi1>, vector<8x32xf32>
    %c4_i32 = arith.constant 4 : i32
    %107 = tpu.dynamic_rotate %104 by %c4_i32 dim 0 : vector<8x32xf32>, i32 -> vector<8x32xf32>
    %c4_i32_48 = arith.constant 4 : i32
    %108 = tpu.dynamic_rotate %106 by %c4_i32_48 dim 0 : vector<8x32xf32>, i32 -> vector<8x32xf32>
    %c4_i32_49 = arith.constant 4 : i32
    %109 = vector.broadcast %c4_i32_49 : i32 to vector<8x32xi32>
    %110 = arith.cmpi sge, %81, %109 : vector<8x32xi32>
    %111 = arith.mulf %106, %107 : vector<8x32xf32>
    %112 = arith.addf %111, %104 : vector<8x32xf32>
    %113 = arith.select %110, %112, %104 : vector<8x32xi1>, vector<8x32xf32>
    %114 = arith.mulf %108, %106 : vector<8x32xf32>
    %115 = arith.select %110, %114, %106 : vector<8x32xi1>, vector<8x32xf32>
    %116 = vector.broadcast %82 : vector<1x32xf32> to vector<8x32xf32>
    %117 = arith.mulf %115, %116 : vector<8x32xf32>
    %118 = arith.addf %117, %113 : vector<8x32xf32>
    %119 = vector.extract_strided_slice %118 {offsets = [7, 0], sizes = [1, 32], strides = [1, 1]} : vector<8x32xf32> to vector<1x32xf32>
    %120 = arith.index_cast %84 : i32 to index
    %c0_50 = arith.constant 0 : index
    %121 = vector.load %arg13[%120, %c0_50] : memref<16x32xf32, #tpu.memory_space<vmem>>, vector<8x32xf32>
    tpu.vector_store %arg13[%120, %c0_50], %118 {strides = array<i32>} : memref<16x32xf32, #tpu.memory_space<vmem>>, vector<8x32xf32>,
    %c1_i32_51 = arith.constant 1 : i32
    %c8_i32_52 = arith.constant 8 : i32
    %122 = arith.muli %c1_i32_51, %c8_i32_52 : i32
    %123 = tpu.assume_multiple %122, 8 : i32
    %124 = arith.index_cast %123 : i32 to index
    %c0_53 = arith.constant 0 : index
    %125 = vector.load %arg12[%124, %c0_53] : memref<16x32xf32, #tpu.memory_space<vmem>>, vector<8x32xf32>
    %126 = arith.index_cast %123 : i32 to index
    %c0_54 = arith.constant 0 : index
    %127 = vector.load %arg13[%126, %c0_54] : memref<16x32xf32, #tpu.memory_space<vmem>>, vector<8x32xf32>
    %c1_i32_55 = arith.constant 1 : i32
    %128 = tpu.dynamic_rotate %127 by %c1_i32_55 dim 0 : vector<8x32xf32>, i32 -> vector<8x32xf32>
    %c1_i32_56 = arith.constant 1 : i32
    %129 = tpu.dynamic_rotate %125 by %c1_i32_56 dim 0 : vector<8x32xf32>, i32 -> vector<8x32xf32>
    %c1_i32_57 = arith.constant 1 : i32
    %130 = vector.broadcast %c1_i32_57 : i32 to vector<8x32xi32>
    %131 = arith.cmpi sge, %81, %130 : vector<8x32xi32>
    %132 = arith.mulf %125, %128 : vector<8x32xf32>
    %133 = arith.addf %132, %127 : vector<8x32xf32>
    %134 = arith.select %131, %133, %127 : vector<8x32xi1>, vector<8x32xf32>
    %135 = arith.mulf %129, %125 : vector<8x32xf32>
    %136 = arith.select %131, %135, %125 : vector<8x32xi1>, vector<8x32xf32>
    %c2_i32_58 = arith.constant 2 : i32
    %137 = tpu.dynamic_rotate %134 by %c2_i32_58 dim 0 : vector<8x32xf32>, i32 -> vector<8x32xf32>
    %c2_i32_59 = arith.constant 2 : i32
    %138 = tpu.dynamic_rotate %136 by %c2_i32_59 dim 0 : vector<8x32xf32>, i32 -> vector<8x32xf32>
    %c2_i32_60 = arith.constant 2 : i32
    %139 = vector.broadcast %c2_i32_60 : i32 to vector<8x32xi32>
    %140 = arith.cmpi sge, %81, %139 : vector<8x32xi32>
    %141 = arith.mulf %136, %137 : vector<8x32xf32>
    %142 = arith.addf %141, %134 : vector<8x32xf32>
    %143 = arith.select %140, %142, %134 : vector<8x32xi1>, vector<8x32xf32>
    %144 = arith.mulf %138, %136 : vector<8x32xf32>
    %145 = arith.select %140, %144, %136 : vector<8x32xi1>, vector<8x32xf32>
    %c4_i32_61 = arith.constant 4 : i32
    %146 = tpu.dynamic_rotate %143 by %c4_i32_61 dim 0 : vector<8x32xf32>, i32 -> vector<8x32xf32>
    %c4_i32_62 = arith.constant 4 : i32
    %147 = tpu.dynamic_rotate %145 by %c4_i32_62 dim 0 : vector<8x32xf32>, i32 -> vector<8x32xf32>
    %c4_i32_63 = arith.constant 4 : i32
    %148 = vector.broadcast %c4_i32_63 : i32 to vector<8x32xi32>
    %149 = arith.cmpi sge, %81, %148 : vector<8x32xi32>
    %150 = arith.mulf %145, %146 : vector<8x32xf32>
    %151 = arith.addf %150, %143 : vector<8x32xf32>
    %152 = arith.select %149, %151, %143 : vector<8x32xi1>, vector<8x32xf32>
    %153 = arith.mulf %147, %145 : vector<8x32xf32>
    %154 = arith.select %149, %153, %145 : vector<8x32xi1>, vector<8x32xf32>
    %155 = vector.broadcast %119 : vector<1x32xf32> to vector<8x32xf32>
    %156 = arith.mulf %154, %155 : vector<8x32xf32>
    %157 = arith.addf %156, %152 : vector<8x32xf32>
    %158 = vector.extract_strided_slice %157 {offsets = [7, 0], sizes = [1, 32], strides = [1, 1]} : vector<8x32xf32> to vector<1x32xf32>
    %159 = arith.index_cast %123 : i32 to index
    %c0_64 = arith.constant 0 : index
    %160 = vector.load %arg13[%159, %c0_64] : memref<16x32xf32, #tpu.memory_space<vmem>>, vector<8x32xf32>
    tpu.vector_store %arg13[%159, %c0_64], %157 {strides = array<i32>} : memref<16x32xf32, #tpu.memory_space<vmem>>, vector<8x32xf32>,
    %c2_i32_65 = arith.constant 2 : i32
    %c0_66 = arith.constant 0 : index
    %c0_67 = arith.constant 0 : index
    %161 = vector.load %arg15[%c0_66, %c0_67] : memref<1x32xf32, #tpu.memory_space<vmem>>, vector<1x32xf32>
    tpu.vector_store %arg15[%c0_66, %c0_67], %158 {strides = array<i32>} : memref<1x32xf32, #tpu.memory_space<vmem>>, vector<1x32xf32>,
    %c0_68 = arith.constant 0 : index
    %c0_69 = arith.constant 0 : index
    %162 = vector.load %arg14[%c0_68, %c0_69] : memref<16x32xbf16, #tpu.memory_space<vmem>>, vector<16x32xbf16>
    %163 = arith.extf %162 : vector<16x32xbf16> to vector<16x32xf32>
    %c0_70 = arith.constant 0 : index
    %c0_71 = arith.constant 0 : index
    %164 = vector.load %arg13[%c0_70, %c0_71] : memref<16x32xf32, #tpu.memory_space<vmem>>, vector<16x32xf32>
    %165 = arith.mulf %163, %164 : vector<16x32xf32>
    %166 = arith.truncf %165 : vector<16x32xf32> to vector<16x32xbf16>
    %c0_72 = arith.constant 0 : index
    %c0_73 = arith.constant 0 : index
    %167 = vector.load %arg9[%c0_72, %c0_73] : memref<32x32xbf16, #tpu.memory_space<vmem>>, vector<32x32xbf16>
    %cst_74 = arith.constant dense<0.000000e+00> : vector<16x32xf32>
    %168 = tpu.matmul %166, %167, %cst_74 {dimension_numbers = #tpu.dot_dimension_numbers<[1], [0], [0], [1], [0, 0, 1, 1], [], []>} : vector<16x32xbf16>, vector<32x32xbf16>, vector<16x32xf32> -> vector<16x32xf32>
    %c0_75 = arith.constant 0 : index
    %c0_76 = arith.constant 0 : index
    %c0_77 = arith.constant 0 : index
    %169 = vector.load %arg10[%c0_75, %c0_76, %c0_77] : memref<1x16x32xf32, #tpu.memory_space<vmem>>, vector<1x16x32xf32>
    %170 = vector.shape_cast %169 : vector<1x16x32xf32> to vector<16x32xf32>
    %171 = vector.shape_cast %168 : vector<16x32xf32> to vector<1x16x32xf32>
    tpu.vector_store %arg10[%c0_75, %c0_76, %c0_77], %171 {strides = array<i32>} : memref<1x16x32xf32, #tpu.memory_space<vmem>>, vector<1x16x32xf32>,
    return
  }
  func.func @transform_0(%arg0: i32, %arg1: i32) -> (i32, i32, i32) {
    %c0_i32 = arith.constant 0 : i32
    %c0_i32_0 = arith.constant 0 : i32
    return %arg0, %arg1, %c0_i32 : i32, i32, i32
  }
  func.func @transform_1(%arg0: i32, %arg1: i32) -> (i32, i32) {
    %c0_i32 = arith.constant 0 : i32
    %c0_i32_0 = arith.constant 0 : i32
    %c0_i32_1 = arith.constant 0 : i32
    return %c0_i32, %c0_i32_0 : i32, i32
  }
  func.func @transform_2(%arg0: i32, %arg1: i32) -> (i32, i32) {
    %c0_i32 = arith.constant 0 : i32
    %c0_i32_0 = arith.constant 0 : i32
    %c0_i32_1 = arith.constant 0 : i32
    return %c0_i32, %c0_i32_0 : i32, i32
  }
  func.func @transform_3(%arg0: i32, %arg1: i32) -> (i32, i32) {
    %c0_i32 = arith.constant 0 : i32
    %c0_i32_0 = arith.constant 0 : i32
    %c0_i32_1 = arith.constant 0 : i32
    return %c0_i32, %c0_i32_0 : i32, i32
  }
  func.func @transform_4(%arg0: i32, %arg1: i32) -> (i32, i32) {
    %c0_i32 = arith.constant 0 : i32
    %c0_i32_0 = arith.constant 0 : i32
    %c0_i32_1 = arith.constant 0 : i32
    return %c0_i32, %c0_i32_0 : i32, i32
  }
  func.func @transform_5(%arg0: i32, %arg1: i32) -> (i32, i32) {
    %c0_i32 = arith.constant 0 : i32
    %c0_i32_0 = arith.constant 0 : i32
    %c0_i32_1 = arith.constant 0 : i32
    return %c0_i32, %c0_i32_0 : i32, i32
  }
  func.func @transform_6(%arg0: i32, %arg1: i32) -> (i32, i32) {
    %c0_i32 = arith.constant 0 : i32
    %c0_i32_0 = arith.constant 0 : i32
    %c0_i32_1 = arith.constant 0 : i32
    return %c0_i32, %c0_i32_0 : i32, i32
  }
  func.func @transform_7(%arg0: i32, %arg1: i32) -> (i32, i32) {
    %c0_i32 = arith.constant 0 : i32
    %c0_i32_0 = arith.constant 0 : i32
    %c0_i32_1 = arith.constant 0 : i32
    return %c0_i32, %c0_i32_0 : i32, i32
  }
  func.func @transform_8(%arg0: i32, %arg1: i32) -> (i32, i32, i32) {
    %c0_i32 = arith.constant 0 : i32
    %c0_i32_0 = arith.constant 0 : i32
    return %arg0, %arg1, %c0_i32 : i32, i32, i32
  }
}

module attributes {stable_mosaic.version = 11 : i64} {
  func.func @_hawk_kernel(%arg0: i32, %arg1: i32, %arg2: memref<1x16x32xf32, #tpu.memory_space<vmem>>, %arg3: memref<32x64xbf16, #tpu.memory_space<vmem>>, %arg4: memref<4x32xf32, #tpu.memory_space<vmem>>, %arg5: memref<1x32xf32, #tpu.memory_space<vmem>>, %arg6: memref<32x64xbf16, #tpu.memory_space<vmem>>, %arg7: memref<1x64xf32, #tpu.memory_space<vmem>>, %arg8: memref<1x32xf32, #tpu.memory_space<vmem>>, %arg9: memref<32x32xbf16, #tpu.memory_space<vmem>>, %arg10: memref<1x16x32xf32, #tpu.memory_space<vmem>>, %arg11: memref<24x32xf32, #tpu.memory_space<vmem>>, %arg12: memref<16x32xf32, #tpu.memory_space<vmem>>, %arg13: memref<16x32xf32, #tpu.memory_space<vmem>>, %arg14: memref<16x32xbf16, #tpu.memory_space<vmem>>, %arg15: memref<1x32xf32, #tpu.memory_space<vmem>>) attributes {dimension_semantics = [#tpu.dimension_semantics<parallel>, #tpu.dimension_semantics<arbitrary>], iteration_bounds = array<i64: 2, 1>, scalar_prefetch = 0 : i64, scratch_operands = 5 : i64, tpu.core_type = #tpu.core_type<tc>, window_params = [{transform_indices = @transform_0, window_bounds = array<i64: 1, 16, 32>}, {pipeline_mode = #tpu.pipeline_mode<synchronous>, transform_indices = @transform_1, window_bounds = array<i64: 32, 64>}, {pipeline_mode = #tpu.pipeline_mode<synchronous>, transform_indices = @transform_2, window_bounds = array<i64: 4, 32>}, {pipeline_mode = #tpu.pipeline_mode<synchronous>, transform_indices = @transform_3, window_bounds = array<i64: 1, 32>}, {pipeline_mode = #tpu.pipeline_mode<synchronous>, transform_indices = @transform_4, window_bounds = array<i64: 32, 64>}, {pipeline_mode = #tpu.pipeline_mode<synchronous>, transform_indices = @transform_5, window_bounds = array<i64: 1, 64>}, {pipeline_mode = #tpu.pipeline_mode<synchronous>, transform_indices = @transform_6, window_bounds = array<i64: 1, 32>}, {pipeline_mode = #tpu.pipeline_mode<synchronous>, transform_indices = @transform_7, window_bounds = array<i64: 32, 32>}, {transform_indices = @transform_8, window_bounds = array<i64: 1, 16, 32>}]} {
    %c0_i32 = arith.constant 0 : i32
    %0 = arith.cmpi eq, %arg1, %c0_i32 : i32
    %1 = arith.extui %0 : i1 to i32
    %c0_i32_0 = arith.constant 0 : i32
    %2 = arith.cmpi ne, %1, %c0_i32_0 : i32
    scf.if %2 {
      %cst_61 = arith.constant 0.000000e+00 : f32
      %175 = vector.broadcast %cst_61 : f32 to vector<1x32xf32>
      %c0_62 = arith.constant 0 : index
      %c0_63 = arith.constant 0 : index
      %176 = vector.load %arg15[%c0_62, %c0_63] : memref<1x32xf32, #tpu.memory_space<vmem>>, vector<1x32xf32>
      tpu.vector_store %arg15[%c0_62, %c0_63], %175 {strides = array<i32>} : memref<1x32xf32, #tpu.memory_space<vmem>>, vector<1x32xf32>,
      %cst_64 = arith.constant 0.000000e+00 : f32
      %177 = vector.broadcast %cst_64 : f32 to vector<3x32xf32>
      %c5_65 = arith.constant 5 : index
      %c0_66 = arith.constant 0 : index
      %178 = vector.load %arg11[%c5_65, %c0_66] : memref<24x32xf32, #tpu.memory_space<vmem>>, vector<3x32xf32>
      tpu.vector_store %arg11[%c5_65, %c0_66], %177 {strides = array<i32>} : memref<24x32xf32, #tpu.memory_space<vmem>>, vector<3x32xf32>,
    } else {
    }
    %c0 = arith.constant 0 : index
    %c0_1 = arith.constant 0 : index
    %c0_2 = arith.constant 0 : index
    %3 = vector.load %arg2[%c0, %c0_1, %c0_2] : memref<1x16x32xf32, #tpu.memory_space<vmem>>, vector<1x16x32xf32>
    %4 = vector.shape_cast %3 : vector<1x16x32xf32> to vector<16x32xf32>
    %5 = arith.truncf %4 : vector<16x32xf32> to vector<16x32xbf16>
    %c0_3 = arith.constant 0 : index
    %c0_4 = arith.constant 0 : index
    %6 = vector.load %arg3[%c0_3, %c0_4] : memref<32x64xbf16, #tpu.memory_space<vmem>>, vector<32x64xbf16>
    %cst = arith.constant dense<0.000000e+00> : vector<16x64xf32>
    %7 = tpu.matmul %5, %6, %cst {dimension_numbers = #tpu.dot_dimension_numbers<[1], [0], [0], [1], [0, 0, 1, 1], [], []>} : vector<16x32xbf16>, vector<32x64xbf16>, vector<16x64xf32> -> vector<16x64xf32>
    %8 = vector.extract_strided_slice %7 {offsets = [0, 0], sizes = [16, 32], strides = [1, 1]} : vector<16x64xf32> to vector<16x32xf32>
    %9 = vector.extract_strided_slice %7 {offsets = [0, 32], sizes = [16, 32], strides = [1, 1]} : vector<16x64xf32> to vector<16x32xf32>
    %10 = arith.mulf %8, %8 : vector<16x32xf32>
    %11 = arith.mulf %8, %10 : vector<16x32xf32>
    %cst_5 = arith.constant 4.471500e-02 : f32
    %12 = vector.broadcast %cst_5 : f32 to vector<16x32xf32>
    %13 = arith.mulf %12, %11 : vector<16x32xf32>
    %14 = arith.addf %8, %13 : vector<16x32xf32>
    %cst_6 = arith.constant 0.797884583 : f32
    %15 = vector.broadcast %cst_6 : f32 to vector<16x32xf32>
    %16 = arith.mulf %15, %14 : vector<16x32xf32>
    %17 = math.tanh %16 : vector<16x32xf32>
    %cst_7 = arith.constant 1.000000e+00 : f32
    %18 = vector.broadcast %cst_7 : f32 to vector<16x32xf32>
    %19 = arith.addf %18, %17 : vector<16x32xf32>
    %cst_8 = arith.constant 5.000000e-01 : f32
    %20 = vector.broadcast %cst_8 : f32 to vector<16x32xf32>
    %21 = arith.mulf %20, %19 : vector<16x32xf32>
    %22 = arith.mulf %8, %21 : vector<16x32xf32>
    %23 = arith.truncf %22 : vector<16x32xf32> to vector<16x32xbf16>
    %c0_9 = arith.constant 0 : index
    %c0_10 = arith.constant 0 : index
    %24 = vector.load %arg14[%c0_9, %c0_10] : memref<16x32xbf16, #tpu.memory_space<vmem>>, vector<16x32xbf16>
    tpu.vector_store %arg14[%c0_9, %c0_10], %23 {strides = array<i32>} : memref<16x32xbf16, #tpu.memory_space<vmem>>, vector<16x32xbf16>,
    %c8 = arith.constant 8 : index
    %c0_11 = arith.constant 0 : index
    %25 = vector.load %arg11[%c8, %c0_11] : memref<24x32xf32, #tpu.memory_space<vmem>>, vector<16x32xf32>
    tpu.vector_store %arg11[%c8, %c0_11], %9 {strides = array<i32>} : memref<24x32xf32, #tpu.memory_space<vmem>>, vector<16x32xf32>,
    %c3 = arith.constant 3 : index
    %c0_12 = arith.constant 0 : index
    %26 = vector.load %arg4[%c3, %c0_12] : memref<4x32xf32, #tpu.memory_space<vmem>>, vector<1x32xf32>
    %27 = vector.broadcast %26 : vector<1x32xf32> to vector<16x32xf32>
    %28 = arith.mulf %9, %27 : vector<16x32xf32>
    %c0_13 = arith.constant 0 : index
    %c0_14 = arith.constant 0 : index
    %29 = vector.load %arg5[%c0_13, %c0_14] : memref<1x32xf32, #tpu.memory_space<vmem>>, vector<1x32xf32>
    %30 = vector.broadcast %29 : vector<1x32xf32> to vector<16x32xf32>
    %31 = arith.addf %28, %30 : vector<16x32xf32>
    %c0_15 = arith.constant 0 : index
    %c0_16 = arith.constant 0 : index
    %32 = vector.load %arg4[%c0_15, %c0_16] : memref<4x32xf32, #tpu.memory_space<vmem>>, vector<1x32xf32>
    %c5 = arith.constant 5 : index
    %c0_17 = arith.constant 0 : index
    %33 = vector.load %arg11[%c5, %c0_17] : memref<24x32xf32, #tpu.memory_space<vmem>>, vector<16x32xf32>
    %34 = vector.broadcast %32 : vector<1x32xf32> to vector<16x32xf32>
    %35 = arith.mulf %34, %33 : vector<16x32xf32>
    %36 = arith.addf %31, %35 : vector<16x32xf32>
    %c1 = arith.constant 1 : index
    %c0_18 = arith.constant 0 : index
    %37 = vector.load %arg4[%c1, %c0_18] : memref<4x32xf32, #tpu.memory_space<vmem>>, vector<1x32xf32>
    %c6 = arith.constant 6 : index
    %c0_19 = arith.constant 0 : index
    %38 = vector.load %arg11[%c6, %c0_19] : memref<24x32xf32, #tpu.memory_space<vmem>>, vector<16x32xf32>
    %39 = vector.broadcast %37 : vector<1x32xf32> to vector<16x32xf32>
    %40 = arith.mulf %39, %38 : vector<16x32xf32>
    %41 = arith.addf %36, %40 : vector<16x32xf32>
    %c2 = arith.constant 2 : index
    %c0_20 = arith.constant 0 : index
    %42 = vector.load %arg4[%c2, %c0_20] : memref<4x32xf32, #tpu.memory_space<vmem>>, vector<1x32xf32>
    %c7 = arith.constant 7 : index
    %c0_21 = arith.constant 0 : index
    %43 = vector.load %arg11[%c7, %c0_21] : memref<24x32xf32, #tpu.memory_space<vmem>>, vector<16x32xf32>
    %44 = vector.broadcast %42 : vector<1x32xf32> to vector<16x32xf32>
    %45 = arith.mulf %44, %43 : vector<16x32xf32>
    %46 = arith.addf %41, %45 : vector<16x32xf32>
    %47 = vector.extract_strided_slice %9 {offsets = [13, 0], sizes = [3, 32], strides = [1, 1]} : vector<16x32xf32> to vector<3x32xf32>
    %c5_22 = arith.constant 5 : index
    %c0_23 = arith.constant 0 : index
    %48 = vector.load %arg11[%c5_22, %c0_23] : memref<24x32xf32, #tpu.memory_space<vmem>>, vector<3x32xf32>
    tpu.vector_store %arg11[%c5_22, %c0_23], %47 {strides = array<i32>} : memref<24x32xf32, #tpu.memory_space<vmem>>, vector<3x32xf32>,
    %49 = arith.truncf %46 : vector<16x32xf32> to vector<16x32xbf16>
    %c0_24 = arith.constant 0 : index
    %c0_25 = arith.constant 0 : index
    %50 = vector.load %arg6[%c0_24, %c0_25] : memref<32x64xbf16, #tpu.memory_space<vmem>>, vector<32x64xbf16>
    %cst_26 = arith.constant dense<0.000000e+00> : vector<16x64xf32>
    %51 = tpu.matmul %49, %50, %cst_26 {dimension_numbers = #tpu.dot_dimension_numbers<[1], [0], [0], [1], [0, 0, 1, 1], [], []>} : vector<16x32xbf16>, vector<32x64xbf16>, vector<16x64xf32> -> vector<16x64xf32>
    %c0_27 = arith.constant 0 : index
    %c0_28 = arith.constant 0 : index
    %52 = vector.load %arg7[%c0_27, %c0_28] : memref<1x64xf32, #tpu.memory_space<vmem>>, vector<1x64xf32>
    %53 = vector.broadcast %52 : vector<1x64xf32> to vector<16x64xf32>
    %54 = arith.addf %51, %53 : vector<16x64xf32>
    %55 = vector.extract_strided_slice %54 {offsets = [0, 0], sizes = [16, 32], strides = [1, 1]} : vector<16x64xf32> to vector<16x32xf32>
    %56 = vector.extract_strided_slice %54 {offsets = [0, 32], sizes = [16, 32], strides = [1, 1]} : vector<16x64xf32> to vector<16x32xf32>
    %c0_29 = arith.constant 0 : index
    %c0_30 = arith.constant 0 : index
    %57 = vector.load %arg8[%c0_29, %c0_30] : memref<1x32xf32, #tpu.memory_space<vmem>>, vector<1x32xf32>
    %58 = arith.negf %55 : vector<16x32xf32>
    %59 = math.exp %58 : vector<16x32xf32>
    %cst_31 = arith.constant 1.000000e+00 : f32
    %60 = vector.broadcast %cst_31 : f32 to vector<16x32xf32>
    %61 = arith.addf %60, %59 : vector<16x32xf32>
    %62 = arith.divf %60, %61 : vector<16x32xf32>
    %63 = vector.broadcast %57 : vector<1x32xf32> to vector<16x32xf32>
    %64 = arith.mulf %63, %62 : vector<16x32xf32>
    %65 = math.exp %64 : vector<16x32xf32>
    %66 = arith.mulf %65, %65 : vector<16x32xf32>
    %cst_32 = arith.constant 1.000000e+00 : f32
    %67 = vector.broadcast %cst_32 : f32 to vector<16x32xf32>
    %68 = arith.subf %67, %66 : vector<16x32xf32>
    %cst_33 = arith.constant 9.99999997E-7 : f32
    %69 = vector.broadcast %cst_33 : f32 to vector<16x32xf32>
    %70 = arith.addf %68, %69 : vector<16x32xf32>
    %71 = math.sqrt %70 : vector<16x32xf32>
    %72 = arith.negf %56 : vector<16x32xf32>
    %73 = math.exp %72 : vector<16x32xf32>
    %cst_34 = arith.constant 1.000000e+00 : f32
    %74 = vector.broadcast %cst_34 : f32 to vector<16x32xf32>
    %75 = arith.addf %74, %73 : vector<16x32xf32>
    %76 = arith.divf %74, %75 : vector<16x32xf32>
    %77 = arith.mulf %71, %76 : vector<16x32xf32>
    %78 = arith.mulf %77, %46 : vector<16x32xf32>
    %c0_35 = arith.constant 0 : index
    %c0_36 = arith.constant 0 : index
    %79 = vector.load %arg12[%c0_35, %c0_36] : memref<16x32xf32, #tpu.memory_space<vmem>>, vector<16x32xf32>
    tpu.vector_store %arg12[%c0_35, %c0_36], %65 {strides = array<i32>} : memref<16x32xf32, #tpu.memory_space<vmem>>, vector<16x32xf32>,
    %c0_37 = arith.constant 0 : index
    %c0_38 = arith.constant 0 : index
    %80 = vector.load %arg13[%c0_37, %c0_38] : memref<16x32xf32, #tpu.memory_space<vmem>>, vector<16x32xf32>
    tpu.vector_store %arg13[%c0_37, %c0_38], %78 {strides = array<i32>} : memref<16x32xf32, #tpu.memory_space<vmem>>, vector<16x32xf32>,
    %c0_39 = arith.constant 0 : index
    %c0_40 = arith.constant 0 : index
    %81 = vector.load %arg15[%c0_39, %c0_40] : memref<1x32xf32, #tpu.memory_space<vmem>>, vector<1x32xf32>
    %c0_i32_41 = arith.constant 0 : i32
    %c8_i32 = arith.constant 8 : i32
    %82 = arith.muli %c0_i32_41, %c8_i32 : i32
    %83 = tpu.assume_multiple %82, 8 : i32
    %84 = arith.index_cast %83 : i32 to index
    %c0_42 = arith.constant 0 : index
    %85 = vector.load %arg12[%84, %c0_42] : memref<16x32xf32, #tpu.memory_space<vmem>>, vector<8x32xf32>
    %86 = arith.index_cast %83 : i32 to index
    %c0_43 = arith.constant 0 : index
    %87 = vector.load %arg13[%86, %c0_43] : memref<16x32xf32, #tpu.memory_space<vmem>>, vector<8x32xf32>
    %88 = vector.extract_strided_slice %85 {offsets = [0, 0], sizes = [1, 32], strides = [1, 1]} : vector<8x32xf32> to vector<1x32xf32>
    %89 = arith.mulf %88, %81 : vector<1x32xf32>
    %90 = vector.extract_strided_slice %87 {offsets = [0, 0], sizes = [1, 32], strides = [1, 1]} : vector<8x32xf32> to vector<1x32xf32>
    %91 = arith.addf %89, %90 : vector<1x32xf32>
    %92 = vector.extract_strided_slice %85 {offsets = [1, 0], sizes = [1, 32], strides = [1, 1]} : vector<8x32xf32> to vector<1x32xf32>
    %93 = arith.mulf %92, %91 : vector<1x32xf32>
    %94 = vector.extract_strided_slice %87 {offsets = [1, 0], sizes = [1, 32], strides = [1, 1]} : vector<8x32xf32> to vector<1x32xf32>
    %95 = arith.addf %93, %94 : vector<1x32xf32>
    %96 = vector.extract_strided_slice %85 {offsets = [2, 0], sizes = [1, 32], strides = [1, 1]} : vector<8x32xf32> to vector<1x32xf32>
    %97 = arith.mulf %96, %95 : vector<1x32xf32>
    %98 = vector.extract_strided_slice %87 {offsets = [2, 0], sizes = [1, 32], strides = [1, 1]} : vector<8x32xf32> to vector<1x32xf32>
    %99 = arith.addf %97, %98 : vector<1x32xf32>
    %100 = vector.extract_strided_slice %85 {offsets = [3, 0], sizes = [1, 32], strides = [1, 1]} : vector<8x32xf32> to vector<1x32xf32>
    %101 = arith.mulf %100, %99 : vector<1x32xf32>
    %102 = vector.extract_strided_slice %87 {offsets = [3, 0], sizes = [1, 32], strides = [1, 1]} : vector<8x32xf32> to vector<1x32xf32>
    %103 = arith.addf %101, %102 : vector<1x32xf32>
    %104 = vector.extract_strided_slice %85 {offsets = [4, 0], sizes = [1, 32], strides = [1, 1]} : vector<8x32xf32> to vector<1x32xf32>
    %105 = arith.mulf %104, %103 : vector<1x32xf32>
    %106 = vector.extract_strided_slice %87 {offsets = [4, 0], sizes = [1, 32], strides = [1, 1]} : vector<8x32xf32> to vector<1x32xf32>
    %107 = arith.addf %105, %106 : vector<1x32xf32>
    %108 = vector.extract_strided_slice %85 {offsets = [5, 0], sizes = [1, 32], strides = [1, 1]} : vector<8x32xf32> to vector<1x32xf32>
    %109 = arith.mulf %108, %107 : vector<1x32xf32>
    %110 = vector.extract_strided_slice %87 {offsets = [5, 0], sizes = [1, 32], strides = [1, 1]} : vector<8x32xf32> to vector<1x32xf32>
    %111 = arith.addf %109, %110 : vector<1x32xf32>
    %112 = vector.extract_strided_slice %85 {offsets = [6, 0], sizes = [1, 32], strides = [1, 1]} : vector<8x32xf32> to vector<1x32xf32>
    %113 = arith.mulf %112, %111 : vector<1x32xf32>
    %114 = vector.extract_strided_slice %87 {offsets = [6, 0], sizes = [1, 32], strides = [1, 1]} : vector<8x32xf32> to vector<1x32xf32>
    %115 = arith.addf %113, %114 : vector<1x32xf32>
    %116 = vector.extract_strided_slice %85 {offsets = [7, 0], sizes = [1, 32], strides = [1, 1]} : vector<8x32xf32> to vector<1x32xf32>
    %117 = arith.mulf %116, %115 : vector<1x32xf32>
    %118 = vector.extract_strided_slice %87 {offsets = [7, 0], sizes = [1, 32], strides = [1, 1]} : vector<8x32xf32> to vector<1x32xf32>
    %119 = arith.addf %117, %118 : vector<1x32xf32>
    %120 = tpu.concatenate %91, %95, %99, %103, %107, %111, %115, %119 in 0 : vector<1x32xf32>, vector<1x32xf32>, vector<1x32xf32>, vector<1x32xf32>, vector<1x32xf32>, vector<1x32xf32>, vector<1x32xf32>, vector<1x32xf32> -> vector<8x32xf32>
    %121 = arith.index_cast %83 : i32 to index
    %c0_44 = arith.constant 0 : index
    %122 = vector.load %arg13[%121, %c0_44] : memref<16x32xf32, #tpu.memory_space<vmem>>, vector<8x32xf32>
    tpu.vector_store %arg13[%121, %c0_44], %120 {strides = array<i32>} : memref<16x32xf32, #tpu.memory_space<vmem>>, vector<8x32xf32>,
    %c1_i32 = arith.constant 1 : i32
    %c8_i32_45 = arith.constant 8 : i32
    %123 = arith.muli %c1_i32, %c8_i32_45 : i32
    %124 = tpu.assume_multiple %123, 8 : i32
    %125 = arith.index_cast %124 : i32 to index
    %c0_46 = arith.constant 0 : index
    %126 = vector.load %arg12[%125, %c0_46] : memref<16x32xf32, #tpu.memory_space<vmem>>, vector<8x32xf32>
    %127 = arith.index_cast %124 : i32 to index
    %c0_47 = arith.constant 0 : index
    %128 = vector.load %arg13[%127, %c0_47] : memref<16x32xf32, #tpu.memory_space<vmem>>, vector<8x32xf32>
    %129 = vector.extract_strided_slice %126 {offsets = [0, 0], sizes = [1, 32], strides = [1, 1]} : vector<8x32xf32> to vector<1x32xf32>
    %130 = arith.mulf %129, %119 : vector<1x32xf32>
    %131 = vector.extract_strided_slice %128 {offsets = [0, 0], sizes = [1, 32], strides = [1, 1]} : vector<8x32xf32> to vector<1x32xf32>
    %132 = arith.addf %130, %131 : vector<1x32xf32>
    %133 = vector.extract_strided_slice %126 {offsets = [1, 0], sizes = [1, 32], strides = [1, 1]} : vector<8x32xf32> to vector<1x32xf32>
    %134 = arith.mulf %133, %132 : vector<1x32xf32>
    %135 = vector.extract_strided_slice %128 {offsets = [1, 0], sizes = [1, 32], strides = [1, 1]} : vector<8x32xf32> to vector<1x32xf32>
    %136 = arith.addf %134, %135 : vector<1x32xf32>
    %137 = vector.extract_strided_slice %126 {offsets = [2, 0], sizes = [1, 32], strides = [1, 1]} : vector<8x32xf32> to vector<1x32xf32>
    %138 = arith.mulf %137, %136 : vector<1x32xf32>
    %139 = vector.extract_strided_slice %128 {offsets = [2, 0], sizes = [1, 32], strides = [1, 1]} : vector<8x32xf32> to vector<1x32xf32>
    %140 = arith.addf %138, %139 : vector<1x32xf32>
    %141 = vector.extract_strided_slice %126 {offsets = [3, 0], sizes = [1, 32], strides = [1, 1]} : vector<8x32xf32> to vector<1x32xf32>
    %142 = arith.mulf %141, %140 : vector<1x32xf32>
    %143 = vector.extract_strided_slice %128 {offsets = [3, 0], sizes = [1, 32], strides = [1, 1]} : vector<8x32xf32> to vector<1x32xf32>
    %144 = arith.addf %142, %143 : vector<1x32xf32>
    %145 = vector.extract_strided_slice %126 {offsets = [4, 0], sizes = [1, 32], strides = [1, 1]} : vector<8x32xf32> to vector<1x32xf32>
    %146 = arith.mulf %145, %144 : vector<1x32xf32>
    %147 = vector.extract_strided_slice %128 {offsets = [4, 0], sizes = [1, 32], strides = [1, 1]} : vector<8x32xf32> to vector<1x32xf32>
    %148 = arith.addf %146, %147 : vector<1x32xf32>
    %149 = vector.extract_strided_slice %126 {offsets = [5, 0], sizes = [1, 32], strides = [1, 1]} : vector<8x32xf32> to vector<1x32xf32>
    %150 = arith.mulf %149, %148 : vector<1x32xf32>
    %151 = vector.extract_strided_slice %128 {offsets = [5, 0], sizes = [1, 32], strides = [1, 1]} : vector<8x32xf32> to vector<1x32xf32>
    %152 = arith.addf %150, %151 : vector<1x32xf32>
    %153 = vector.extract_strided_slice %126 {offsets = [6, 0], sizes = [1, 32], strides = [1, 1]} : vector<8x32xf32> to vector<1x32xf32>
    %154 = arith.mulf %153, %152 : vector<1x32xf32>
    %155 = vector.extract_strided_slice %128 {offsets = [6, 0], sizes = [1, 32], strides = [1, 1]} : vector<8x32xf32> to vector<1x32xf32>
    %156 = arith.addf %154, %155 : vector<1x32xf32>
    %157 = vector.extract_strided_slice %126 {offsets = [7, 0], sizes = [1, 32], strides = [1, 1]} : vector<8x32xf32> to vector<1x32xf32>
    %158 = arith.mulf %157, %156 : vector<1x32xf32>
    %159 = vector.extract_strided_slice %128 {offsets = [7, 0], sizes = [1, 32], strides = [1, 1]} : vector<8x32xf32> to vector<1x32xf32>
    %160 = arith.addf %158, %159 : vector<1x32xf32>
    %161 = tpu.concatenate %132, %136, %140, %144, %148, %152, %156, %160 in 0 : vector<1x32xf32>, vector<1x32xf32>, vector<1x32xf32>, vector<1x32xf32>, vector<1x32xf32>, vector<1x32xf32>, vector<1x32xf32>, vector<1x32xf32> -> vector<8x32xf32>
    %162 = arith.index_cast %124 : i32 to index
    %c0_48 = arith.constant 0 : index
    %163 = vector.load %arg13[%162, %c0_48] : memref<16x32xf32, #tpu.memory_space<vmem>>, vector<8x32xf32>
    tpu.vector_store %arg13[%162, %c0_48], %161 {strides = array<i32>} : memref<16x32xf32, #tpu.memory_space<vmem>>, vector<8x32xf32>,
    %c2_i32 = arith.constant 2 : i32
    %c0_49 = arith.constant 0 : index
    %c0_50 = arith.constant 0 : index
    %164 = vector.load %arg15[%c0_49, %c0_50] : memref<1x32xf32, #tpu.memory_space<vmem>>, vector<1x32xf32>
    tpu.vector_store %arg15[%c0_49, %c0_50], %160 {strides = array<i32>} : memref<1x32xf32, #tpu.memory_space<vmem>>, vector<1x32xf32>,
    %c0_51 = arith.constant 0 : index
    %c0_52 = arith.constant 0 : index
    %165 = vector.load %arg14[%c0_51, %c0_52] : memref<16x32xbf16, #tpu.memory_space<vmem>>, vector<16x32xbf16>
    %166 = arith.extf %165 : vector<16x32xbf16> to vector<16x32xf32>
    %c0_53 = arith.constant 0 : index
    %c0_54 = arith.constant 0 : index
    %167 = vector.load %arg13[%c0_53, %c0_54] : memref<16x32xf32, #tpu.memory_space<vmem>>, vector<16x32xf32>
    %168 = arith.mulf %166, %167 : vector<16x32xf32>
    %169 = arith.truncf %168 : vector<16x32xf32> to vector<16x32xbf16>
    %c0_55 = arith.constant 0 : index
    %c0_56 = arith.constant 0 : index
    %170 = vector.load %arg9[%c0_55, %c0_56] : memref<32x32xbf16, #tpu.memory_space<vmem>>, vector<32x32xbf16>
    %cst_57 = arith.constant dense<0.000000e+00> : vector<16x32xf32>
    %171 = tpu.matmul %169, %170, %cst_57 {dimension_numbers = #tpu.dot_dimension_numbers<[1], [0], [0], [1], [0, 0, 1, 1], [], []>} : vector<16x32xbf16>, vector<32x32xbf16>, vector<16x32xf32> -> vector<16x32xf32>
    %c0_58 = arith.constant 0 : index
    %c0_59 = arith.constant 0 : index
    %c0_60 = arith.constant 0 : index
    %172 = vector.load %arg10[%c0_58, %c0_59, %c0_60] : memref<1x16x32xf32, #tpu.memory_space<vmem>>, vector<1x16x32xf32>
    %173 = vector.shape_cast %172 : vector<1x16x32xf32> to vector<16x32xf32>
    %174 = vector.shape_cast %171 : vector<16x32xf32> to vector<1x16x32xf32>
    tpu.vector_store %arg10[%c0_58, %c0_59, %c0_60], %174 {strides = array<i32>} : memref<1x16x32xf32, #tpu.memory_space<vmem>>, vector<1x16x32xf32>,
    return
  }
  func.func @transform_0(%arg0: i32, %arg1: i32) -> (i32, i32, i32) {
    %c0_i32 = arith.constant 0 : i32
    %c0_i32_0 = arith.constant 0 : i32
    return %arg0, %arg1, %c0_i32 : i32, i32, i32
  }
  func.func @transform_1(%arg0: i32, %arg1: i32) -> (i32, i32) {
    %c0_i32 = arith.constant 0 : i32
    %c0_i32_0 = arith.constant 0 : i32
    %c0_i32_1 = arith.constant 0 : i32
    return %c0_i32, %c0_i32_0 : i32, i32
  }
  func.func @transform_2(%arg0: i32, %arg1: i32) -> (i32, i32) {
    %c0_i32 = arith.constant 0 : i32
    %c0_i32_0 = arith.constant 0 : i32
    %c0_i32_1 = arith.constant 0 : i32
    return %c0_i32, %c0_i32_0 : i32, i32
  }
  func.func @transform_3(%arg0: i32, %arg1: i32) -> (i32, i32) {
    %c0_i32 = arith.constant 0 : i32
    %c0_i32_0 = arith.constant 0 : i32
    %c0_i32_1 = arith.constant 0 : i32
    return %c0_i32, %c0_i32_0 : i32, i32
  }
  func.func @transform_4(%arg0: i32, %arg1: i32) -> (i32, i32) {
    %c0_i32 = arith.constant 0 : i32
    %c0_i32_0 = arith.constant 0 : i32
    %c0_i32_1 = arith.constant 0 : i32
    return %c0_i32, %c0_i32_0 : i32, i32
  }
  func.func @transform_5(%arg0: i32, %arg1: i32) -> (i32, i32) {
    %c0_i32 = arith.constant 0 : i32
    %c0_i32_0 = arith.constant 0 : i32
    %c0_i32_1 = arith.constant 0 : i32
    return %c0_i32, %c0_i32_0 : i32, i32
  }
  func.func @transform_6(%arg0: i32, %arg1: i32) -> (i32, i32) {
    %c0_i32 = arith.constant 0 : i32
    %c0_i32_0 = arith.constant 0 : i32
    %c0_i32_1 = arith.constant 0 : i32
    return %c0_i32, %c0_i32_0 : i32, i32
  }
  func.func @transform_7(%arg0: i32, %arg1: i32) -> (i32, i32) {
    %c0_i32 = arith.constant 0 : i32
    %c0_i32_0 = arith.constant 0 : i32
    %c0_i32_1 = arith.constant 0 : i32
    return %c0_i32, %c0_i32_0 : i32, i32
  }
  func.func @transform_8(%arg0: i32, %arg1: i32) -> (i32, i32, i32) {
    %c0_i32 = arith.constant 0 : i32
    %c0_i32_0 = arith.constant 0 : i32
    return %arg0, %arg1, %c0_i32 : i32, i32, i32
  }
}

</mosaic_0001>

<llo_original>
// kernel: hawk_forward.1
$region0: #{hawk_forward.1}
  #allocation0 [shape = 'u32[]', space=smem, size = 0x4, offset = 0x4, fixed_abs, tag = 'smem constant byte address 0x4 - core index']
  #allocation1 [shape = 'u32[144,128]{1,0:T(1,128)}', space=vmem, size = 0x12000, scoped, tag = 'internal scratch']
  #allocation2 [shape = 'f32[24,32]{1,0:T(8,128)}', space=vmem, size = 0x3000, scoped, tag = 'scratch operand']
  #allocation3 [shape = 'f32[16,32]{1,0:T(8,128)}', space=vmem, size = 0x2000, scoped, tag = 'scratch operand']
  #allocation4 [shape = 'f32[16,32]{1,0:T(8,128)}', space=vmem, size = 0x2000, scoped, tag = 'scratch operand']
  #allocation5 [shape = 'bf16[16,32]{1,0:T(16,128)(2,1)}', space=vmem, size = 0x1000, scoped, tag = 'scratch operand']
  #allocation6 [shape = 'f32[1,32]{1,0:T(1,128)}', space=vmem, size = 0x200, scoped, tag = 'scratch operand']
  %s0 = inlined_call_operand.hbm [shape: f32[2,16,32], index: 0, kind: input, shape index: {}]
  %s1 = inlined_call_operand.vmem [shape: bf16[32,64], index: 1, kind: input, shape index: {}]
  %s2 = inlined_call_operand.vmem [shape: f32[4,32], index: 2, kind: input, shape index: {}]
  %s3 = inlined_call_operand.vmem [shape: f32[1,32], index: 3, kind: input, shape index: {}]
  %s4 = inlined_call_operand.hbm [shape: bf16[32,64], index: 4, kind: input, shape index: {}]
  %s5 = inlined_call_operand.vmem [shape: f32[1,64], index: 5, kind: input, shape index: {}]
  %s6 = inlined_call_operand.hbm [shape: f32[1,32], index: 6, kind: input, shape index: {}]
  %s7 = inlined_call_operand.hbm [shape: bf16[32,32], index: 7, kind: input, shape index: {}]
  %s8 = inlined_call_operand.hbm [shape: f32[2,16,32], index: 8, kind: output, shape index: {}]
  %s9 = sld [smem:[#allocation0]]
  $region85: #{hawk_forward.1} parent=0
    _
  %s11 = ssub.s32 1, %s9
  %s12 = scalar_select 0, %s11, %s9
  $region1: #{hawk_forward.1} parent=0
    #allocation7 [shape = 'u8[16384]{0}', space=vmem, size = 0x4000, scoped, tag = 'input window, operand 0']
    #allocation8 [shape = 's32[2]{0}', space=sflag, size = 0x8, scoped, tag = 'scoped memory for hawk_forward.1']
    #allocation9 [shape = 's32[2]{0}', space=sflag, size = 0x8, scoped, tag = 'scoped memory for hawk_forward.1']
    #allocation10 [shape = 'u8[8192]{0}', space=vmem, size = 0x2000, scoped, tag = 'input window, operand 4, single buffered']
    #allocation11 [shape = 's32[1]{0}', space=sflag, size = 0x4, scoped, tag = 'scoped memory for hawk_forward.1']
    #allocation12 [shape = 'u8[512]{0}', space=vmem, size = 0x400, scoped, tag = 'input window, operand 6, single buffered']
    #allocation13 [shape = 'u8[8192]{0}', space=vmem, size = 0x2000, scoped, tag = 'input window, operand 7, single buffered']
    #allocation14 [shape = 's32[1]{0}', space=sflag, size = 0x4, scoped, tag = 'scoped memory for hawk_forward.1']
    #allocation15 [shape = 'u8[16384]{0}', space=vmem, size = 0x4000, scoped, tag = 'output window, operand 0']
    %13 = vsyncpa [#allocation8], 0
    %s14 = scalar_lea.sflag [#allocation8], 1
    %15 = vsyncpa %s14, 0
    %16 = vsyncpa [#allocation11], 0
    %17 = vsyncpa [#allocation14], 0
    %18 = vsyncpa [#allocation9], 0
    %s19 = scalar_lea.sflag [#allocation9], 1
    %20 = vsyncpa %s19, 0
    loop: start=0, step=1, limit=4
    $region2: #{hawk_forward.1} parent=1 // loop_pre_header
      _
    $region3: #{hawk_forward.1} parent=1 // loop_header
      %s22 = sphi 0, %s26
      %p23 = scmp.ge.s32.totalorder %s22, 4
      %s29 = sphi 0, %s41
      %s30 = sphi 0, %s37
      %s31 = sphi 0, %s29
      %s32 = sphi 0, %s30
      %s33 = sphi 0, %s31
      %s34 = sphi 0, %s32
      %s46 = sphi 0, %s48
      %s49 = sphi 0, %s46
      %s50 = sphi 0, %s49
      %s66 = sphi 0, %s50
      %s70 = sphi 0, %s70
      %s72 = sphi 0, %s70
      %s73 = sphi 0, %s72
      %s87 = sphi 0, %s73
      %s91 = sphi 0, %s91
      %s93 = sphi 0, %s91
      %s94 = sphi 0, %s93
      %s108 = sphi 0, %s94
      %s112 = sphi 0, %s112
      %s114 = sphi 0, %s112
      %s115 = sphi 0, %s114
      %s129 = sphi 0, %s115
      %s133 = sphi 0, %s133
      %s135 = sphi 0, %s133
      %s136 = sphi 0, %s135
      %s150 = sphi 0, %s136
      %s154 = sphi 0, %s154
      %s156 = sphi 0, %s154
      %s157 = sphi 0, %s156
      %s171 = sphi 0, %s157
      %s175 = sphi 0, %s175
      %s177 = sphi 0, %s175
      %s178 = sphi 0, %s177
      %s192 = sphi 0, %s178
      %s196 = sphi 0, %s196
      %s198 = sphi 0, %s196
      %s199 = sphi 0, %s198
      %s213 = sphi 0, %s199
      %s221 = sphi 0, %s223
      %s224 = sphi 0, %s221
      %s225 = sphi 0, %s224
      %s241 = sphi 0, %s225
    $region4: #{hawk_forward.1} parent=1 // loop_header_branch
      %25 = sbr.rel (%p23) target = $region8
    $region5: #{hawk_forward.1} parent=1 // loop_body
      %s27 = ssub.s32 %s22, 1
      %s28 = ssub.s32 %s22, 2
      %s35 = sadd.s32 1, %s30
      %p36 = scmp.ge.s32.totalorder %s35, 1
      %s37 = scalar_select %p36, 0, %s35
      %s38 = sadd.s32 1, %s29
      %s39 = scalar_select %p36, %s38, %s29
      %p40 = scmp.ge.s32.totalorder %s39, 2
      %s41 = scalar_select %p40, 0, %s39
      %s42 = ssub.s32 %s29, %s41
      %s43 = ssub.s32 %s30, %s37
      %s44 = sor.u32 %s42, %s43
      %p45 = scmp.eq.s32.totalorder %s44, 0
      %s47 = sadd.s32 %s46, 1
      %s48 = scalar_select %p45, %s46, %s47
      %p51 = pneg %p45
      %p52 = scmp.eq.s32.totalorder %s22, 1
      %p53 = por %p51, %p52
      %p54 = scmp.ne.s32.totalorder %s46, %s49
      %p55 = scmp.eq.s32.totalorder %s22, 0
      %p56 = por %p54, %p55
      %p57 = scmp.ne.s32.totalorder %s46, %s49
      %p58 = scmp.eq.s32.totalorder %s27, 1
      %p59 = por %p57, %p58
      %p60 = scmp.ne.s32.totalorder %s49, %s50
      %p61 = scmp.eq.s32.totalorder %s27, 0
      %p62 = por %p60, %p61
      %p63 = scmp.ne.s32.totalorder %s49, %s50
      %p64 = scmp.eq.s32.totalorder %s28, 1
      %p65 = por %p63, %p64
      %p67 = scmp.ne.s32.totalorder %s50, %s66
      %p68 = scmp.eq.s32.totalorder %s28, 0
      %p69 = por %p67, %p68
      %s71 = sadd.s32 %s70, 1
      %p74 = scmp.eq.s32.totalorder %s22, 1
      %p75 = scmp.ne.s32.totalorder %s70, %s72
      %p76 = scmp.eq.s32.totalorder %s22, 0
      %p77 = por %p75, %p76
      %p78 = scmp.ne.s32.totalorder %s70, %s72
      %p79 = scmp.eq.s32.totalorder %s27, 1
      %p80 = por %p78, %p79
      %p81 = scmp.ne.s32.totalorder %s72, %s73
      %p82 = scmp.eq.s32.totalorder %s27, 0
      %p83 = por %p81, %p82
      %p84 = scmp.ne.s32.totalorder %s72, %s73
      %p85 = scmp.eq.s32.totalorder %s28, 1
      %p86 = por %p84, %p85
      %p88 = scmp.ne.s32.totalorder %s73, %s87
      %p89 = scmp.eq.s32.totalorder %s28, 0
      %p90 = por %p88, %p89
      %s92 = sadd.s32 %s91, 1
      %p95 = scmp.eq.s32.totalorder %s22, 1
      %p96 = scmp.ne.s32.totalorder %s91, %s93
      %p97 = scmp.eq.s32.totalorder %s22, 0
      %p98 = por %p96, %p97
      %p99 = scmp.ne.s32.totalorder %s91, %s93
      %p100 = scmp.eq.s32.totalorder %s27, 1
      %p101 = por %p99, %p100
      %p102 = scmp.ne.s32.totalorder %s93, %s94
      %p103 = scmp.eq.s32.totalorder %s27, 0
      %p104 = por %p102, %p103
      %p105 = scmp.ne.s32.totalorder %s93, %s94
      %p106 = scmp.eq.s32.totalorder %s28, 1
      %p107 = por %p105, %p106
      %p109 = scmp.ne.s32.totalorder %s94, %s108
      %p110 = scmp.eq.s32.totalorder %s28, 0
      %p111 = por %p109, %p110
      %s113 = sadd.s32 %s112, 1
      %p116 = scmp.eq.s32.totalorder %s22, 1
      %p117 = scmp.ne.s32.totalorder %s112, %s114
      %p118 = scmp.eq.s32.totalorder %s22, 0
      %p119 = por %p117, %p118
      %p120 = scmp.ne.s32.totalorder %s112, %s114
      %p121 = scmp.eq.s32.totalorder %s27, 1
      %p122 = por %p120, %p121
      %p123 = scmp.ne.s32.totalorder %s114, %s115
      %p124 = scmp.eq.s32.totalorder %s27, 0
      %p125 = por %p123, %p124
      %p126 = scmp.ne.s32.totalorder %s114, %s115
      %p127 = scmp.eq.s32.totalorder %s28, 1
      %p128 = por %p126, %p127
      %p130 = scmp.ne.s32.totalorder %s115, %s129
      %p131 = scmp.eq.s32.totalorder %s28, 0
      %p132 = por %p130, %p131
      %s134 = sadd.s32 %s133, 1
      %p137 = scmp.eq.s32.totalorder %s22, 1
      %p138 = scmp.ne.s32.totalorder %s133, %s135
      %p139 = scmp.eq.s32.totalorder %s22, 0
      %p140 = por %p138, %p139
      %p141 = scmp.ne.s32.totalorder %s133, %s135
      %p142 = scmp.eq.s32.totalorder %s27, 1
      %p143 = por %p141, %p142
      %p144 = scmp.ne.s32.totalorder %s135, %s136
      %p145 = scmp.eq.s32.totalorder %s27, 0
      %p146 = por %p144, %p145
      %p147 = scmp.ne.s32.totalorder %s135, %s136
      %p148 = scmp.eq.s32.totalorder %s28, 1
      %p149 = por %p147, %p148
      %p151 = scmp.ne.s32.totalorder %s136, %s150
      %p152 = scmp.eq.s32.totalorder %s28, 0
      %p153 = por %p151, %p152
      %s155 = sadd.s32 %s154, 1
      %p158 = scmp.eq.s32.totalorder %s22, 1
      %p159 = scmp.ne.s32.totalorder %s154, %s156
      %p160 = scmp.eq.s32.totalorder %s22, 0
      %p161 = por %p159, %p160
      %p162 = scmp.ne.s32.totalorder %s154, %s156
      %p163 = scmp.eq.s32.totalorder %s27, 1
      %p164 = por %p162, %p163
      %p165 = scmp.ne.s32.totalorder %s156, %s157
      %p166 = scmp.eq.s32.totalorder %s27, 0
      %p167 = por %p165, %p166
      %p168 = scmp.ne.s32.totalorder %s156, %s157
      %p169 = scmp.eq.s32.totalorder %s28, 1
      %p170 = por %p168, %p169
      %p172 = scmp.ne.s32.totalorder %s157, %s171
      %p173 = scmp.eq.s32.totalorder %s28, 0
      %p174 = por %p172, %p173
      %s176 = sadd.s32 %s175, 1
      %p179 = scmp.eq.s32.totalorder %s22, 1
      %p180 = scmp.ne.s32.totalorder %s175, %s177
      %p181 = scmp.eq.s32.totalorder %s22, 0
      %p182 = por %p180, %p181
      %p183 = scmp.ne.s32.totalorder %s175, %s177
      %p184 = scmp.eq.s32.totalorder %s27, 1
      %p185 = por %p183, %p184
      %p186 = scmp.ne.s32.totalorder %s177, %s178
      %p187 = scmp.eq.s32.totalorder %s27, 0
      %p188 = por %p186, %p187
      %p189 = scmp.ne.s32.totalorder %s177, %s178
      %p190 = scmp.eq.s32.totalorder %s28, 1
      %p191 = por %p189, %p190
      %p193 = scmp.ne.s32.totalorder %s178, %s192
      %p194 = scmp.eq.s32.totalorder %s28, 0
      %p195 = por %p193, %p194
      %s197 = sadd.s32 %s196, 1
      %p200 = scmp.eq.s32.totalorder %s22, 1
      %p201 = scmp.ne.s32.totalorder %s196, %s198
      %p202 = scmp.eq.s32.totalorder %s22, 0
      %p203 = por %p201, %p202
      %p204 = scmp.ne.s32.totalorder %s196, %s198
      %p205 = scmp.eq.s32.totalorder %s27, 1
      %p206 = por %p204, %p205
      %p207 = scmp.ne.s32.totalorder %s198, %s199
      %p208 = scmp.eq.s32.totalorder %s27, 0
      %p209 = por %p207, %p208
      %p210 = scmp.ne.s32.totalorder %s198, %s199
      %p211 = scmp.eq.s32.totalorder %s28, 1
      %p212 = por %p210, %p211
      %p214 = scmp.ne.s32.totalorder %s199, %s213
      %p215 = scmp.eq.s32.totalorder %s28, 0
      %p216 = por %p214, %p215
      %s217 = ssub.s32 %s29, %s41
      %s218 = ssub.s32 %s30, %s37
      %s219 = sor.u32 %s217, %s218
      %p220 = scmp.eq.s32.totalorder %s219, 0
      %s222 = sadd.s32 %s221, 1
      %s223 = scalar_select %p220, %s221, %s222
      %p226 = pneg %p220
      %p227 = scmp.eq.s32.totalorder %s22, 1
      %p228 = por %p226, %p227
      %p229 = scmp.ne.s32.totalorder %s221, %s224
      %p230 = scmp.eq.s32.totalorder %s22, 0
      %p231 = por %p229, %p230
      %p232 = scmp.ne.s32.totalorder %s221, %s224
      %p233 = scmp.eq.s32.totalorder %s27, 1
      %p234 = por %p232, %p233
      %p235 = scmp.ne.s32.totalorder %s224, %s225
      %p236 = scmp.eq.s32.totalorder %s27, 0
      %p237 = por %p235, %p236
      %p238 = scmp.ne.s32.totalorder %s224, %s225
      %p239 = scmp.eq.s32.totalorder %s28, 1
      %p240 = por %p238, %p239
      %p242 = scmp.ne.s32.totalorder %s225, %s241
      %p243 = scmp.eq.s32.totalorder %s28, 0
      %p244 = por %p242, %p243
      %p245 = scmp.le.s32.totalorder 1, %s22
      %p246 = scmp.lt.s32.totalorder %s22, 3
      %p247 = pnand %p245, %p246
      %p248 = pneg %p247
      // Predicated region
      $region9: #{hawk_forward.1} parent=5 // pred_check
        _
      $region10: #{hawk_forward.1} parent=5 // pred_check_branch
        %250 = sbr.rel (%p247) target = $region12
      $region11: #{hawk_forward.1} parent=5 // pred_region
        %s251 = ssub.s32 %s22, 1
        // Predicated region
        $region13: #{hawk_forward.1} parent=11 // pred_check
          %p252 = pneg %p83
        $region14: #{hawk_forward.1} parent=11 // pred_check_branch
          %254 = sbr.rel (%p252) target = $region16
        $region15: #{hawk_forward.1} parent=11 // pred_region
          _
        $region16: #{hawk_forward.1} parent=11 // pred_fallthru
          _
        // Predicated region
        $region17: #{hawk_forward.1} parent=11 // pred_check
          %p255 = pneg %p104
        $region18: #{hawk_forward.1} parent=11 // pred_check_branch
          %257 = sbr.rel (%p255) target = $region20
        $region19: #{hawk_forward.1} parent=11 // pred_region
          _
        $region20: #{hawk_forward.1} parent=11 // pred_fallthru
          _
        // Predicated region
        $region21: #{hawk_forward.1} parent=11 // pred_check
          %p258 = pneg %p125
        $region22: #{hawk_forward.1} parent=11 // pred_check_branch
          %260 = sbr.rel (%p258) target = $region24
        $region23: #{hawk_forward.1} parent=11 // pred_region
          _
        $region24: #{hawk_forward.1} parent=11 // pred_fallthru
          _
        // Predicated region
        $region25: #{hawk_forward.1} parent=11 // pred_check
          %p261 = pneg %p146
        $region26: #{hawk_forward.1} parent=11 // pred_check_branch
          %263 = sbr.rel (%p261) target = $region28
        $region27: #{hawk_forward.1} parent=11 // pred_region
          %s265 = ssub.s32 256, 256
          %266 = vsyncadd [#allocation11], %s265
          %s267 = sshll.u32 [#allocation10], 4
          %s268 = int_to_ptr.vmem [resolvable:$true] %s267
          %273 = dma.hbm_to_vmem [thread:$0]  %s4, 256, %s268, [#allocation11], 64, 64, 4
        $region28: #{hawk_forward.1} parent=11 // pred_fallthru
          _
        // Predicated region
        $region29: #{hawk_forward.1} parent=11 // pred_check
          %p274 = pneg %p167
        $region30: #{hawk_forward.1} parent=11 // pred_check_branch
          %276 = sbr.rel (%p274) target = $region32
        $region31: #{hawk_forward.1} parent=11 // pred_region
          _
        $region32: #{hawk_forward.1} parent=11 // pred_fallthru
          _
        // Predicated region
        $region33: #{hawk_forward.1} parent=11 // pred_check
          %p277 = pneg %p188
        $region34: #{hawk_forward.1} parent=11 // pred_check_branch
          %279 = sbr.rel (%p277) target = $region36
        $region35: #{hawk_forward.1} parent=11 // pred_region
          %s281 = ssub.s32 16, 16
          %282 = vsyncadd [#allocation11], %s281
          %s284 = sshll.u32 [#allocation12], 4
          %s285 = int_to_ptr.vmem [resolvable:$true] %s284
          %287 = dma.hbm_to_vmem [thread:$0]  %s6, 16, %s285, [#allocation11]
        $region36: #{hawk_forward.1} parent=11 // pred_fallthru
          _
        // Predicated region
        $region37: #{hawk_forward.1} parent=11 // pred_check
          %p288 = pneg %p209
        $region38: #{hawk_forward.1} parent=11 // pred_check_branch
          %290 = sbr.rel (%p288) target = $region40
        $region39: #{hawk_forward.1} parent=11 // pred_region
          %s292 = ssub.s32 256, 256
          %293 = vsyncadd [#allocation14], %s292
          %s294 = sshll.u32 [#allocation13], 4
          %s295 = int_to_ptr.vmem [resolvable:$true] %s294
          %300 = dma.hbm_to_vmem [thread:$0]  %s7, 256, %s295, [#allocation14], 64, 64, 4
        $region40: #{hawk_forward.1} parent=11 // pred_fallthru
          _
      $region12: #{hawk_forward.1} parent=5 // pred_fallthru
        _
      %p301 = scmp.lt.s32.totalorder %s22, 2
      // Predicated region
      $region41: #{hawk_forward.1} parent=5 // pred_check
        %p302 = pneg %p301
      $region42: #{hawk_forward.1} parent=5 // pred_check_branch
        %304 = sbr.rel (%p302) target = $region44
      $region43: #{hawk_forward.1} parent=5 // pred_region
        // Predicated region
        $region45: #{hawk_forward.1} parent=43 // pred_check
          %p305 = pneg %p56
        $region46: #{hawk_forward.1} parent=43 // pred_check_branch
          %307 = sbr.rel (%p305) target = $region48
        $region47: #{hawk_forward.1} parent=43 // pred_region
          %s308 = sand.u32 %s46, 1
          %s309 = scalar_lea.sflag [#allocation8], %s308
          %s310 = sand.u32 %s46, 1
          %s311 = smul.addr %s310, 16
          %s312 = scalar_lea.vmem [#allocation7], %s311
          %s313 = smul.u32 2, %s30
          %s315 = ssub.s32 256, 256
          %316 = vsyncadd %s309, %s315
          %s317 = smul.addr %s29, 2
          %s318 = sadd.s32 %s313, %s317
          %s319 = smul.addr %s318, 128
          %s320 = scalar_lea.hbm %s0, %s319
          %s321 = sshll.u32 %s312, 4
          %s322 = int_to_ptr.vmem [resolvable:$true] %s321
          %327 = dma.hbm_to_vmem [thread:$0]  %s320, 256, %s322, %s309, 128, 128, 8
        $region48: #{hawk_forward.1} parent=43 // pred_fallthru
          _
      $region44: #{hawk_forward.1} parent=5 // pred_fallthru
        _
      %p328 = scmp.le.s32.totalorder 1, %s22
      %p329 = scmp.lt.s32.totalorder %s22, 3
      %p330 = pnand %p328, %p329
      %p331 = pneg %p330
      // Predicated region
      $region49: #{hawk_forward.1} parent=5 // pred_check
        _
      $region50: #{hawk_forward.1} parent=5 // pred_check_branch
        %333 = sbr.rel (%p330) target = $region52
      $region51: #{hawk_forward.1} parent=5 // pred_region
        %s334 = ssub.s32 %s22, 1
        %s335 = sand.u32 %s49, 1
        %s336 = scalar_lea.sflag [#allocation8], %s335
        %s337 = sand.u32 %s49, 1
        %s338 = smul.addr %s337, 16
        %s339 = scalar_lea.vmem [#allocation7], %s338
        // Predicated region
        $region53: #{hawk_forward.1} parent=51 // pred_check
          %p340 = pneg %p62
        $region54: #{hawk_forward.1} parent=51 // pred_check_branch
          %342 = sbr.rel (%p340) target = $region56
        $region55: #{hawk_forward.1} parent=51 // pred_region
          %343 = dma.done %s336, 256
        $region56: #{hawk_forward.1} parent=51 // pred_fallthru
          _
        // Predicated region
        $region57: #{hawk_forward.1} parent=51 // pred_check
          %p344 = pneg %p146
        $region58: #{hawk_forward.1} parent=51 // pred_check_branch
          %346 = sbr.rel (%p344) target = $region60
        $region59: #{hawk_forward.1} parent=51 // pred_region
          %347 = dma.done [#allocation11], 256
        $region60: #{hawk_forward.1} parent=51 // pred_fallthru
          _
        // Predicated region
        $region61: #{hawk_forward.1} parent=51 // pred_check
          %p348 = pneg %p188
        $region62: #{hawk_forward.1} parent=51 // pred_check_branch
          %350 = sbr.rel (%p348) target = $region64
        $region63: #{hawk_forward.1} parent=51 // pred_region
          %351 = dma.done [#allocation11], 16
        $region64: #{hawk_forward.1} parent=51 // pred_fallthru
          _
        // Predicated region
        $region65: #{hawk_forward.1} parent=51 // pred_check
          %p352 = pneg %p209
        $region66: #{hawk_forward.1} parent=51 // pred_check_branch
          %354 = sbr.rel (%p352) target = $region68
        $region67: #{hawk_forward.1} parent=51 // pred_region
          %355 = dma.done [#allocation14], 256
        $region68: #{hawk_forward.1} parent=51 // pred_fallthru
          _
        %s356 = sand.u32 %s49, 1
        %s357 = scalar_lea.sflag [#allocation8], %s356
        %s358 = sand.u32 %s49, 1
        %s359 = smul.addr %s358, 16
        %s360 = scalar_lea.vmem [#allocation7], %s359
        %p361 = pneg %p62
        %p362 = pneg %p59
        %p363 = pneg %p83
        %p364 = pneg %p80
        %p365 = pneg %p104
        %p366 = pneg %p101
        %p367 = pneg %p125
        %p368 = pneg %p122
        %p369 = pneg %p146
        %p370 = pneg %p143
        %p371 = pneg %p167
        %p372 = pneg %p164
        %p373 = pneg %p188
        %p374 = pneg %p185
        %p375 = pneg %p209
        %p376 = pneg %p206
        %p377 = pneg %p237
        %p378 = pneg %p234
        %s379 = sand.u32 %s224, 1
        %s380 = scalar_lea.sflag [#allocation9], %s379
        %s381 = sand.u32 %s224, 1
        %s382 = smul.addr %s381, 16
        %s383 = scalar_lea.vmem [#allocation15], %s382
        %s384 = smul.u32 2, %s32
        %s385 = smul.u32 2, %s32
        %p387 = scmp.eq.s32.totalorder %s32, 0
        // Predicated region
        $region69: #{hawk_forward.1} parent=51 // pred_check
          %p388 = pneg %p387
        $region70: #{hawk_forward.1} parent=51 // pred_check_branch
          %390 = sbr.rel (%p388) target = $region72
        $region71: #{hawk_forward.1} parent=51 // pred_region
          %vm391 = vcmask 253952
          %392 = vst.msk [vmem:[#allocation6] sm:$0x1] %vm391, 0.0
          %vm393 = vcmask 256000
          %394 = vst.msk [vmem:[#allocation2 + $0x5] sm:$0x7] %vm393, 0.0
        $region72: #{hawk_forward.1} parent=51 // pred_fallthru
          _
        %v395 = vld [vmem:[%s339] sm:$0xff]
        %v396 = vld [vmem:[%s339 + $0x8] sm:$0xff]
        %v397 = vpack.c.bf16 %v396, %v395
        %v398 = vld [vmem:[%s1] sm:$0xf]
        %v399 = vld [vmem:[%s1 + $0x4] sm:$0xf]
        %v400 = vld [vmem:[%s1 + $0x8] sm:$0xf]
        %v401 = vld [vmem:[%s1 + $0xc] sm:$0xf]
        %v406 = vunpack.c.l.b16 %v398
        %v407 = vunpack.c.l.b16 %v399
        %v408 = vunpack.c.l.b16 %v400
        %v409 = vunpack.c.l.b16 %v401
        %v410 = vpack.c.b16 %v407, %v406
        %v411 = vpack.c.b16 %v409, %v408
        %vm414 = vcmask 261120
        %v416 = vsel %vm414, %v397, 0
        %418 = vmatprep.subr.bf16.mxu0 0
        %419 = vmatpush1.bf16.msra.mxu0 %v410
        %420 = vmatprep.subr.bf16.mxu0 0
        %421 = vmatpush1.bf16.msra.mxu0 %v411
        %422 = vmatprep.subr.bf16.mxu0 0
        %423 = vmatpush1.bf16.msra.mxu0 0
        %424 = vmatprep.subr.bf16.mxu0 0
        %425 = vmatpush1.bf16.msra.mxu0 0
        %426 = vmatprep.subr.bf16.mxu0 0
        %427 = vmatpush1.bf16.msra.mxu0 0
        %428 = vmatprep.subr.bf16.mxu0 0
        %429 = vmatpush1.bf16.msra.mxu0 0
        %430 = vmatprep.subr.bf16.mxu0 0
        %431 = vmatpush1.bf16.msra.mxu0 0
        %432 = vmatprep.subr.bf16.mxu0 0
        %433 = vmatpush1.bf16.msra.mxu0 0
        %434 = vmatprep.subr.bf16.mxu0 0
        %435 = vmatpush1.bf16.msra.mxu0 0
        %436 = vmatprep.subr.bf16.mxu0 0
        %437 = vmatpush1.bf16.msra.mxu0 0
        %438 = vmatprep.subr.bf16.mxu0 0
        %439 = vmatpush1.bf16.msra.mxu0 0
        %440 = vmatprep.subr.bf16.mxu0 0
        %441 = vmatpush1.bf16.msra.mxu0 0
        %442 = vmatprep.subr.bf16.mxu0 0
        %443 = vmatpush1.bf16.msra.mxu0 0
        %444 = vmatprep.subr.bf16.mxu0 0
        %445 = vmatpush1.bf16.msra.mxu0 0
        %446 = vmatprep.subr.bf16.mxu0 0
        %447 = vmatpush1.bf16.msra.mxu0 0
        %448 = vmatprep.subr.bf16.mxu0 0
        %449 = vmatpush1.bf16.msra.mxu0 0
        %450 = vmatprep.mubr.bf16.mxu0 0
        %451 = vmatmul.mubr.bf16.gmra.mrb[0].mxu0 %v416
        %v452 = vpop.f32.mrb[0].mxu0
        %v453 = vadd.f32 0.0, %v452
        %v454 = vpop.f32.mrb[0].mxu0
        %v455 = vpop.f32.mrb[0].mxu0
        %v456 = vadd.f32 0.0, %v455
        %v457 = vpop.f32.mrb[0].mxu0
        %458 = vdwg.mxu0
        %v459 = vmul.f32 %v453, %v453
        %v460 = vmul.f32 %v456, %v456
        %v461 = vmul.f32 %v453, %v459
        %v462 = vmul.f32 %v456, %v460
        %v463 = vmul.f32 %v461, 0.044715
        %v464 = vmul.f32 %v462, 0.044715
        %v465 = vadd.f32 %v453, %v463
        %v466 = vadd.f32 %v456, %v464
        %v467 = vmul.f32 %v465, 0.7978846
        %v468 = vmul.f32 %v466, 0.7978846
        %v469 = vtanh.pop %v467
        %v470 = vtanh.pop %v468
        %v471 = vadd.f32 %v469, 1.0
        %v472 = vadd.f32 %v470, 1.0
        %v473 = vmul.f32 %v471, 0.5
        %v474 = vmul.f32 %v472, 0.5
        %v475 = vmul.f32 %v453, %v473
        %v476 = vmul.f32 %v456, %v474
        %v477 = vpack.c.bf16 %v476, %v475
        %478 = vst.msk [vmem:[#allocation5] sm:$0xff] %vm414, %v477
        %481 = vrot.lane.b32.xlu0 %v453, 96
        %v482 = vpop.permute.xlu0 %481
        %483 = vrot.lane.b32.xlu0 %v456, 96
        %v484 = vpop.permute.xlu0 %483
        %487 = vst.msk [vmem:[#allocation2 + $0x8] sm:$0xff] %vm414, %v482
        %488 = vst.msk [vmem:[#allocation2 + $0x10] sm:$0xff] %vm414, %v484
        %v489 = vld [vmem:[%s2 + $0x3] sm:$0x1]
        %v490 = vlaneseq
        %v491 = vshrl.u32 %v490, 7
        %v492 = vsub.s32 0, %v491
        %v493 = vrot.slane %v489, %v492
        %495 = vrot.lane.b32.xlu0 %v493, 32
        %v496 = vpop.permute.xlu0 %495
        %v498 = vmul.f32 %v453, %v496
        %v499 = vmul.f32 %v456, %v496
        %v500 = vld [vmem:[%s3] sm:$0x1]
        %v502 = vlaneseq
        %v503 = vshrl.u32 %v502, 7
        %v504 = vsub.s32 0, %v503
        %v505 = vrot.slane %v500, %v504
        %506 = vrot.lane.b32.xlu0 %v505, 32
        %v507 = vpop.permute.xlu0 %506
        %v509 = vadd.f32 %v498, %v507
        %v510 = vadd.f32 %v499, %v507
        %v511 = vld [vmem:[%s2] sm:$0x1]
        %v512 = vld [vmem:[#allocation2 + $0x5] sm:$0xff]
        %v513 = vld [vmem:[#allocation2 + $0xd] sm:$0xff]
        %v514 = vlaneseq
        %v515 = vshrl.u32 %v514, 7
        %v516 = vsub.s32 0, %v515
        %v517 = vrot.slane %v511, %v516
        %v518 = vmul.f32 %v517, %v512
        %v519 = vmul.f32 %v517, %v513
        %522 = vrot.lane.b32.xlu0 %v518, 32
        %v523 = vpop.permute.xlu0 %522
        %524 = vrot.lane.b32.xlu0 %v519, 32
        %v525 = vpop.permute.xlu0 %524
        %v528 = vadd.f32 %v509, %v523
        %v529 = vadd.f32 %v510, %v525
        %v530 = vld [vmem:[%s2 + $0x1] sm:$0x1]
        %v531 = vld [vmem:[#allocation2 + $0x6] sm:$0xff]
        %v532 = vld [vmem:[#allocation2 + $0xe] sm:$0xff]
        %v533 = vlaneseq
        %v534 = vshrl.u32 %v533, 7
        %v535 = vsub.s32 0, %v534
        %v536 = vrot.slane %v530, %v535
        %v537 = vmul.f32 %v536, %v531
        %v538 = vmul.f32 %v536, %v532
        %541 = vrot.lane.b32.xlu0 %v537, 32
        %v542 = vpop.permute.xlu0 %541
        %543 = vrot.lane.b32.xlu0 %v538, 32
        %v544 = vpop.permute.xlu0 %543
        %v547 = vadd.f32 %v528, %v542
        %v548 = vadd.f32 %v529, %v544
        %v549 = vld [vmem:[%s2 + $0x2] sm:$0x1]
        %v550 = vld [vmem:[#allocation2 + $0x7] sm:$0xff]
        %v551 = vld [vmem:[#allocation2 + $0xf] sm:$0xff]
        %v552 = vlaneseq
        %v553 = vshrl.u32 %v552, 7
        %v554 = vsub.s32 0, %v553
        %v555 = vrot.slane %v549, %v554
        %v556 = vmul.f32 %v555, %v550
        %v557 = vmul.f32 %v555, %v551
        %560 = vrot.lane.b32.xlu0 %v556, 32
        %v561 = vpop.permute.xlu0 %560
        %562 = vrot.lane.b32.xlu0 %v557, 32
        %v563 = vpop.permute.xlu0 %562
        %v566 = vadd.f32 %v547, %v561
        %v567 = vadd.f32 %v548, %v563
        %vm568 = vcmask 261125
        %569 = vst.msk [vmem:[#allocation2] sm:$0xe0] %vm568, %v484
        %v570 = vpack.c.bf16 %v567, %v566
        %v571 = vld [vmem:[#allocation10] sm:$0xf]
        %v572 = vld [vmem:[#allocation10 + $0x4] sm:$0xf]
        %v573 = vld [vmem:[#allocation10 + $0x8] sm:$0xf]
        %v574 = vld [vmem:[#allocation10 + $0xc] sm:$0xf]
        %v575 = vld [vmem:[%s5] sm:$0x1]
        %v577 = vlaneseq
        %v578 = vshrl.u32 %v577, 7
        %v579 = vsub.s32 0, %v578
        %v580 = vrot.slane %v575, %v579
        %583 = vrot.lane.b32.xlu0 %v570, 96
        %v584 = vpop.permute.xlu0 %583
        %v589 = vunpack.c.l.b16 %v571
        %v590 = vunpack.c.l.b16 %v572
        %v591 = vunpack.c.l.b16 %v573
        %v592 = vunpack.c.l.b16 %v574
        %v593 = vpack.c.b16 %v590, %v589
        %v594 = vpack.c.b16 %v592, %v591
        %v598 = vsel %vm414, %v584, 0
        %600 = vmatprep.subr.bf16.mxu0 0
        %601 = vmatpush1.bf16.msra.mxu0 %v593
        %602 = vmatprep.subr.bf16.mxu0 0
        %603 = vmatpush1.bf16.msra.mxu0 %v594
        %604 = vmatprep.subr.bf16.mxu0 0
        %605 = vmatpush1.bf16.msra.mxu0 0
        %606 = vmatprep.subr.bf16.mxu0 0
        %607 = vmatpush1.bf16.msra.mxu0 0
        %608 = vmatprep.subr.bf16.mxu0 0
        %609 = vmatpush1.bf16.msra.mxu0 0
        %610 = vmatprep.subr.bf16.mxu0 0
        %611 = vmatpush1.bf16.msra.mxu0 0
        %612 = vmatprep.subr.bf16.mxu0 0
        %613 = vmatpush1.bf16.msra.mxu0 0
        %614 = vmatprep.subr.bf16.mxu0 0
        %615 = vmatpush1.bf16.msra.mxu0 0
        %616 = vmatprep.subr.bf16.mxu0 0
        %617 = vmatpush1.bf16.msra.mxu0 0
        %618 = vmatprep.subr.bf16.mxu0 0
        %619 = vmatpush1.bf16.msra.mxu0 0
        %620 = vmatprep.subr.bf16.mxu0 0
        %621 = vmatpush1.bf16.msra.mxu0 0
        %622 = vmatprep.subr.bf16.mxu0 0
        %623 = vmatpush1.bf16.msra.mxu0 0
        %624 = vmatprep.subr.bf16.mxu0 0
        %625 = vmatpush1.bf16.msra.mxu0 0
        %626 = vmatprep.subr.bf16.mxu0 0
        %627 = vmatpush1.bf16.msra.mxu0 0
        %628 = vmatprep.subr.bf16.mxu0 0
        %629 = vmatpush1.bf16.msra.mxu0 0
        %630 = vmatprep.subr.bf16.mxu0 0
        %631 = vmatpush1.bf16.msra.mxu0 0
        %632 = vmatprep.mubr.bf16.mxu0 0
        %633 = vmatmul.mubr.bf16.gmra.mrb[0].mxu0 %v598
        %v634 = vpop.f32.mrb[0].mxu0
        %v635 = vadd.f32 %v580, %v634
        %v636 = vpop.f32.mrb[0].mxu0
        %v637 = vpop.f32.mrb[0].mxu0
        %v638 = vadd.f32 %v580, %v637
        %v639 = vpop.f32.mrb[0].mxu0
        %640 = vdwg.mxu0
        %v641 = vld [vmem:[#allocation12] sm:$0x1]
        %v642 = vxor.u32 %v635, 2147483648
        %v643 = vxor.u32 %v638, 2147483648
        %v644 = vmul.f32 %v642, 1.442695
        %v645 = vpow.pop %v644
        %v646 = vmul.f32 %v643, 1.442695
        %v647 = vpow.pop %v646
        %v648 = vadd.f32 %v645, 1.0
        %v649 = vadd.f32 %v647, 1.0
        %v650 = vrcp.pop %v648
        %v651 = vmul.f32 1.0, %v650
        %v652 = vrcp.pop %v649
        %v653 = vmul.f32 1.0, %v652
        %v655 = vlaneseq
        %v656 = vshrl.u32 %v655, 7
        %v657 = vsub.s32 0, %v656
        %v658 = vrot.slane %v641, %v657
        %v660 = vmul.f32 %v658, %v651
        %v661 = vmul.f32 %v658, %v653
        %v662 = vmul.f32 %v660, 1.442695
        %v663 = vpow.pop %v662
        %v664 = vmul.f32 %v661, 1.442695
        %v665 = vpow.pop %v664
        %v666 = vmul.f32 %v663, %v663
        %v667 = vmul.f32 %v665, %v665
        %v668 = vsub.f32 1.0, %v666
        %v669 = vsub.f32 1.0, %v667
        %v670 = vadd.f32 %v668, 1e-06
        %v671 = vadd.f32 %v669, 1e-06
        %v672 = vrsqrt.pop %v670
        %v673 = vmul.f32 %v670, %v672
        %vm674 = vcmp.eq.f32.partialorder %v670, inf
        %v675 = vsel %vm674, %v670, %v673
        %vm676 = vcmp.eq.f32.partialorder %v670, 0.0
        %v677 = vand.u32 %v670, 2147483648
        %v678 = vsel %vm676, %v677, %v675
        %v679 = vrsqrt.pop %v671
        %v680 = vmul.f32 %v671, %v679
        %vm681 = vcmp.eq.f32.partialorder %v671, inf
        %v682 = vsel %vm681, %v671, %v680
        %vm683 = vcmp.eq.f32.partialorder %v671, 0.0
        %v684 = vand.u32 %v671, 2147483648
        %v685 = vsel %vm683, %v684, %v682
        %688 = vrot.lane.b32.xlu0 %v651, 96
        %v689 = vpop.permute.xlu0 %688
        %690 = vrot.lane.b32.xlu0 %v653, 96
        %v691 = vpop.permute.xlu0 %690
        %v694 = vmul.f32 %v678, %v689
        %v695 = vmul.f32 %v685, %v691
        %698 = vrot.lane.b32.xlu0 %v566, 96
        %v699 = vpop.permute.xlu0 %698
        %700 = vrot.lane.b32.xlu0 %v567, 96
        %v701 = vpop.permute.xlu0 %700
        %v704 = vmul.f32 %v694, %v699
        %v705 = vmul.f32 %v695, %v701
        %706 = vst.msk [vmem:[#allocation3] sm:$0xff] %vm414, %v663
        %707 = vst.msk [vmem:[#allocation3 + $0x8] sm:$0xff] %vm414, %v665
        %708 = vst.msk [vmem:[#allocation4] sm:$0xff] %vm414, %v704
        %709 = vst.msk [vmem:[#allocation4 + $0x8] sm:$0xff] %vm414, %v705
        %v710 = vlaneseq
        %v711 = vshrl.u32 %v710, 7
        %v712 = vld [vmem:[#allocation6] sm:$0x1]
        %v713 = vld [vmem:[#allocation3] sm:$0xff]
        %v714 = vld [vmem:[#allocation4] sm:$0xff]
        %v715 = vrot.slane %v714, 7
        %v716 = vrot.slane %v713, 7
        %vm717 = vcmp.ge.s32.totalorder %v711, 1
        %v718 = vmul.f32 %v713, %v715
        %v719 = vadd.f32 %v718, %v714
        %v720 = vsel %vm717, %v719, %v714
        %v721 = vmul.f32 %v716, %v713
        %v722 = vsel %vm717, %v721, %v713
        %v723 = vrot.slane %v720, 6
        %v724 = vrot.slane %v722, 6
        %vm725 = vcmp.ge.s32.totalorder %v711, 2
        %v726 = vmul.f32 %v722, %v723
        %v727 = vadd.f32 %v726, %v720
        %v728 = vsel %vm725, %v727, %v720
        %v729 = vmul.f32 %v724, %v722
        %v730 = vsel %vm725, %v729, %v722
        %v731 = vrot.slane %v728, 4
        %v732 = vrot.slane %v730, 4
        %vm733 = vcmp.ge.s32.totalorder %v711, 4
        %v734 = vmul.f32 %v730, %v731
        %v735 = vadd.f32 %v734, %v728
        %v736 = vsel %vm733, %v735, %v728
        %v737 = vmul.f32 %v732, %v730
        %v738 = vsel %vm733, %v737, %v730
        %v740 = vlaneseq
        %v741 = vshrl.u32 %v740, 7
        %v742 = vsub.s32 0, %v741
        %v743 = vrot.slane %v712, %v742
        %v745 = vmul.f32 %v738, %v743
        %v746 = vadd.f32 %v745, %v736
        %747 = vst.msk [vmem:[#allocation4] sm:$0xff] %vm414, %v746
        %s748 = scalar_lea.vmem [#allocation3], 8
        %v749 = vld [vmem:[%s748] sm:$0xff]
        %s750 = scalar_lea.vmem [#allocation4], 8
        %v751 = vld [vmem:[%s750] sm:$0xff]
        %v752 = vrot.slane %v751, 7
        %v753 = vrot.slane %v749, 7
        %v754 = vmul.f32 %v749, %v752
        %v755 = vadd.f32 %v754, %v751
        %v756 = vsel %vm717, %v755, %v751
        %v757 = vmul.f32 %v753, %v749
        %v758 = vsel %vm717, %v757, %v749
        %v759 = vrot.slane %v756, 6
        %v760 = vrot.slane %v758, 6
        %v761 = vmul.f32 %v758, %v759
        %v762 = vadd.f32 %v761, %v756
        %v763 = vsel %vm725, %v762, %v756
        %v764 = vmul.f32 %v760, %v758
        %v765 = vsel %vm725, %v764, %v758
        %v766 = vrot.slane %v763, 4
        %v767 = vrot.slane %v765, 4
        %v768 = vmul.f32 %v765, %v766
        %v769 = vadd.f32 %v768, %v763
        %v770 = vsel %vm733, %v769, %v763
        %v771 = vmul.f32 %v767, %v765
        %v772 = vsel %vm733, %v771, %v765
        %v773 = vlaneseq
        %v774 = vshrl.u32 %v773, 7
        %v775 = vsub.s32 7, %v774
        %v776 = vrot.slane %v746, %v775
        %v777 = vmul.f32 %v772, %v776
        %v778 = vadd.f32 %v777, %v770
        %779 = vst.msk [vmem:[%s750] sm:$0xff] %vm414, %v778
        %vm780 = vcmask 261127
        %781 = vst.msk [vmem:[#allocation6 - $0x7] sm:$0x80] %vm780, %v778
        %v782 = vld [vmem:[#allocation5] sm:$0xff]
        %v783 = vunpack.c.l.bf16 %v782
        %v784 = vunpack.c.h.bf16 %v782
        %v785 = vld [vmem:[#allocation4] sm:$0xff]
        %v786 = vld [vmem:[#allocation4 + $0x8] sm:$0xff]
        %v787 = vmul.f32 %v783, %v785
        %v788 = vmul.f32 %v784, %v786
        %v789 = vpack.c.bf16 %v788, %v787
        %v790 = vld [vmem:[#allocation13] sm:$0xf]
        %v791 = vld [vmem:[#allocation13 + $0x4] sm:$0xf]
        %v792 = vld [vmem:[#allocation13 + $0x8] sm:$0xf]
        %v793 = vld [vmem:[#allocation13 + $0xc] sm:$0xf]
        %v798 = vunpack.c.l.b16 %v790
        %v799 = vunpack.c.l.b16 %v791
        %v800 = vunpack.c.l.b16 %v792
        %v801 = vunpack.c.l.b16 %v793
        %v802 = vpack.c.b16 %v799, %v798
        %v803 = vpack.c.b16 %v801, %v800
        %v807 = vsel %vm414, %v789, 0
        %809 = vmatprep.subr.bf16.mxu0 0
        %810 = vmatpush1.bf16.msra.mxu0 %v802
        %811 = vmatprep.subr.bf16.mxu0 0
        %812 = vmatpush1.bf16.msra.mxu0 %v803
        %813 = vmatprep.subr.bf16.mxu0 0
        %814 = vmatpush1.bf16.msra.mxu0 0
        %815 = vmatprep.subr.bf16.mxu0 0
        %816 = vmatpush1.bf16.msra.mxu0 0
        %817 = vmatprep.subr.bf16.mxu0 0
        %818 = vmatpush1.bf16.msra.mxu0 0
        %819 = vmatprep.subr.bf16.mxu0 0
        %820 = vmatpush1.bf16.msra.mxu0 0
        %821 = vmatprep.subr.bf16.mxu0 0
        %822 = vmatpush1.bf16.msra.mxu0 0
        %823 = vmatprep.subr.bf16.mxu0 0
        %824 = vmatpush1.bf16.msra.mxu0 0
        %825 = vmatprep.subr.bf16.mxu0 0
        %826 = vmatpush1.bf16.msra.mxu0 0
        %827 = vmatprep.subr.bf16.mxu0 0
        %828 = vmatpush1.bf16.msra.mxu0 0
        %829 = vmatprep.subr.bf16.mxu0 0
        %830 = vmatpush1.bf16.msra.mxu0 0
        %831 = vmatprep.subr.bf16.mxu0 0
        %832 = vmatpush1.bf16.msra.mxu0 0
        %833 = vmatprep.subr.bf16.mxu0 0
        %834 = vmatpush1.bf16.msra.mxu0 0
        %835 = vmatprep.subr.bf16.mxu0 0
        %836 = vmatpush1.bf16.msra.mxu0 0
        %837 = vmatprep.subr.bf16.mxu0 0
        %838 = vmatpush1.bf16.msra.mxu0 0
        %839 = vmatprep.subr.bf16.mxu0 0
        %840 = vmatpush1.bf16.msra.mxu0 0
        %841 = vmatprep.mubr.bf16.mxu0 0
        %842 = vmatmul.mubr.bf16.gmra.mrb[0].mxu0 %v807
        %v843 = vpop.f32.mrb[0].mxu0
        %v844 = vadd.f32 0.0, %v843
        %v845 = vpop.f32.mrb[0].mxu0
        %v846 = vpop.f32.mrb[0].mxu0
        %v847 = vadd.f32 0.0, %v846
        %v848 = vpop.f32.mrb[0].mxu0
        %849 = vdwg.mxu0
        %850 = vst.msk [vmem:[%s383] sm:$0xff] %vm414, %v844
        %851 = vst.msk [vmem:[%s383 + $0x8] sm:$0xff] %vm414, %v847
        %s852 = sand.u32 %s224, 1
        %s853 = scalar_lea.sflag [#allocation9], %s852
        %s854 = sand.u32 %s224, 1
        %s855 = smul.addr %s854, 16
        %s856 = scalar_lea.vmem [#allocation15], %s855
        // Predicated region
        $region73: #{hawk_forward.1} parent=51 // pred_check
          %p857 = pneg %p234
        $region74: #{hawk_forward.1} parent=51 // pred_check_branch
          %859 = sbr.rel (%p857) target = $region76
        $region75: #{hawk_forward.1} parent=51 // pred_region
          %s860 = smul.u32 2, %s32
          %s862 = ssub.s32 256, 256
          %863 = vsyncadd %s853, %s862
          %s864 = smul.addr %s31, 2
          %s865 = sadd.s32 %s860, %s864
          %s866 = smul.addr %s865, 128
          %s867 = scalar_lea.hbm %s8, %s866
          %s868 = sshll.u32 %s856, 4
          %s869 = int_to_ptr.vmem [resolvable:$true] %s868
          %874 = dma.vmem_to_hbm [thread:$0]  %s869, 256, %s867, %s853, 128, 128, 8
        $region76: #{hawk_forward.1} parent=51 // pred_fallthru
          _
      $region52: #{hawk_forward.1} parent=5 // pred_fallthru
        _
      %p875 = scmp.le.s32.totalorder 2, %s22
      // Predicated region
      $region77: #{hawk_forward.1} parent=5 // pred_check
        %p876 = pneg %p875
      $region78: #{hawk_forward.1} parent=5 // pred_check_branch
        %878 = sbr.rel (%p876) target = $region80
      $region79: #{hawk_forward.1} parent=5 // pred_region
        %s879 = ssub.s32 %s22, 2
        // Predicated region
        $region81: #{hawk_forward.1} parent=79 // pred_check
          %p880 = pneg %p240
        $region82: #{hawk_forward.1} parent=79 // pred_check_branch
          %882 = sbr.rel (%p880) target = $region84
        $region83: #{hawk_forward.1} parent=79 // pred_region
          %s883 = sand.u32 %s225, 1
          %s884 = scalar_lea.sflag [#allocation9], %s883
          %s885 = sand.u32 %s225, 1
          %s886 = smul.addr %s885, 16
          %s887 = scalar_lea.vmem [#allocation15], %s886
          %888 = dma.done %s884, 256
        $region84: #{hawk_forward.1} parent=79 // pred_fallthru
          _
      $region80: #{hawk_forward.1} parent=5 // pred_fallthru
        _
    $region6: #{hawk_forward.1} parent=1 // loop_footer
      %s26 = sadd.s32 1, %s22
    $region7: #{hawk_forward.1} parent=1 // loop_footer_branch
      %21 = sbr.rel target = $region3
    $region8: #{hawk_forward.1} parent=1 // loop_exit
      _
    %889 = vsyncpa [#allocation8], 1
    %s890 = scalar_lea.sflag [#allocation8], 1
    %891 = vsyncpa %s890, 1
    %892 = vsyncpa [#allocation11], 1
    %893 = vsyncpa [#allocation14], 1
    %894 = vsyncpa [#allocation9], 1
    %s895 = scalar_lea.sflag [#allocation9], 1
    %896 = vsyncpa %s895, 1

// kernel: hawk_forward.1
$region0: #{hawk_forward.1}
  #allocation0 [shape = 'u32[]', space=smem, size = 0x4, offset = 0x4, fixed_abs, tag = 'smem constant byte address 0x4 - core index']
  #allocation1 [shape = 'u32[144,128]{1,0:T(1,128)}', space=vmem, size = 0x12000, scoped, tag = 'internal scratch']
  #allocation2 [shape = 'f32[24,32]{1,0:T(8,128)}', space=vmem, size = 0x3000, scoped, tag = 'scratch operand']
  #allocation3 [shape = 'f32[16,32]{1,0:T(8,128)}', space=vmem, size = 0x2000, scoped, tag = 'scratch operand']
  #allocation4 [shape = 'f32[16,32]{1,0:T(8,128)}', space=vmem, size = 0x2000, scoped, tag = 'scratch operand']
  #allocation5 [shape = 'bf16[16,32]{1,0:T(16,128)(2,1)}', space=vmem, size = 0x1000, scoped, tag = 'scratch operand']
  #allocation6 [shape = 'f32[1,32]{1,0:T(1,128)}', space=vmem, size = 0x200, scoped, tag = 'scratch operand']
  %s0 = inlined_call_operand.hbm [shape: f32[2,16,32], index: 0, kind: input, shape index: {}]
  %s1 = inlined_call_operand.vmem [shape: bf16[32,64], index: 1, kind: input, shape index: {}]
  %s2 = inlined_call_operand.vmem [shape: f32[4,32], index: 2, kind: input, shape index: {}]
  %s3 = inlined_call_operand.vmem [shape: f32[1,32], index: 3, kind: input, shape index: {}]
  %s4 = inlined_call_operand.hbm [shape: bf16[32,64], index: 4, kind: input, shape index: {}]
  %s5 = inlined_call_operand.vmem [shape: f32[1,64], index: 5, kind: input, shape index: {}]
  %s6 = inlined_call_operand.hbm [shape: f32[1,32], index: 6, kind: input, shape index: {}]
  %s7 = inlined_call_operand.hbm [shape: bf16[32,32], index: 7, kind: input, shape index: {}]
  %s8 = inlined_call_operand.hbm [shape: f32[2,16,32], index: 8, kind: output, shape index: {}]
  %s9 = sld [smem:[#allocation0]]
  $region85: #{hawk_forward.1} parent=0
    _
  %s11 = ssub.s32 1, %s9
  %s12 = scalar_select 0, %s11, %s9
  $region1: #{hawk_forward.1} parent=0
    #allocation7 [shape = 'u8[16384]{0}', space=vmem, size = 0x4000, scoped, tag = 'input window, operand 0']
    #allocation8 [shape = 's32[2]{0}', space=sflag, size = 0x8, scoped, tag = 'scoped memory for hawk_forward.1']
    #allocation9 [shape = 's32[2]{0}', space=sflag, size = 0x8, scoped, tag = 'scoped memory for hawk_forward.1']
    #allocation10 [shape = 'u8[8192]{0}', space=vmem, size = 0x2000, scoped, tag = 'input window, operand 4, single buffered']
    #allocation11 [shape = 's32[1]{0}', space=sflag, size = 0x4, scoped, tag = 'scoped memory for hawk_forward.1']
    #allocation12 [shape = 'u8[512]{0}', space=vmem, size = 0x400, scoped, tag = 'input window, operand 6, single buffered']
    #allocation13 [shape = 'u8[8192]{0}', space=vmem, size = 0x2000, scoped, tag = 'input window, operand 7, single buffered']
    #allocation14 [shape = 's32[1]{0}', space=sflag, size = 0x4, scoped, tag = 'scoped memory for hawk_forward.1']
    #allocation15 [shape = 'u8[16384]{0}', space=vmem, size = 0x4000, scoped, tag = 'output window, operand 0']
    %13 = vsyncpa [#allocation8], 0
    %s14 = scalar_lea.sflag [#allocation8], 1
    %15 = vsyncpa %s14, 0
    %16 = vsyncpa [#allocation11], 0
    %17 = vsyncpa [#allocation14], 0
    %18 = vsyncpa [#allocation9], 0
    %s19 = scalar_lea.sflag [#allocation9], 1
    %20 = vsyncpa %s19, 0
    loop: start=0, step=1, limit=4
    $region2: #{hawk_forward.1} parent=1 // loop_pre_header
      _
    $region3: #{hawk_forward.1} parent=1 // loop_header
      %s22 = sphi 0, %s26
      %p23 = scmp.ge.s32.totalorder %s22, 4
      %s29 = sphi 0, %s41
      %s30 = sphi 0, %s37
      %s31 = sphi 0, %s29
      %s32 = sphi 0, %s30
      %s33 = sphi 0, %s31
      %s34 = sphi 0, %s32
      %s46 = sphi 0, %s48
      %s49 = sphi 0, %s46
      %s50 = sphi 0, %s49
      %s66 = sphi 0, %s50
      %s70 = sphi 0, %s70
      %s72 = sphi 0, %s70
      %s73 = sphi 0, %s72
      %s87 = sphi 0, %s73
      %s91 = sphi 0, %s91
      %s93 = sphi 0, %s91
      %s94 = sphi 0, %s93
      %s108 = sphi 0, %s94
      %s112 = sphi 0, %s112
      %s114 = sphi 0, %s112
      %s115 = sphi 0, %s114
      %s129 = sphi 0, %s115
      %s133 = sphi 0, %s133
      %s135 = sphi 0, %s133
      %s136 = sphi 0, %s135
      %s150 = sphi 0, %s136
      %s154 = sphi 0, %s154
      %s156 = sphi 0, %s154
      %s157 = sphi 0, %s156
      %s171 = sphi 0, %s157
      %s175 = sphi 0, %s175
      %s177 = sphi 0, %s175
      %s178 = sphi 0, %s177
      %s192 = sphi 0, %s178
      %s196 = sphi 0, %s196
      %s198 = sphi 0, %s196
      %s199 = sphi 0, %s198
      %s213 = sphi 0, %s199
      %s221 = sphi 0, %s223
      %s224 = sphi 0, %s221
      %s225 = sphi 0, %s224
      %s241 = sphi 0, %s225
    $region4: #{hawk_forward.1} parent=1 // loop_header_branch
      %25 = sbr.rel (%p23) target = $region8
    $region5: #{hawk_forward.1} parent=1 // loop_body
      %s27 = ssub.s32 %s22, 1
      %s28 = ssub.s32 %s22, 2
      %s35 = sadd.s32 1, %s30
      %p36 = scmp.ge.s32.totalorder %s35, 1
      %s37 = scalar_select %p36, 0, %s35
      %s38 = sadd.s32 1, %s29
      %s39 = scalar_select %p36, %s38, %s29
      %p40 = scmp.ge.s32.totalorder %s39, 2
      %s41 = scalar_select %p40, 0, %s39
      %s42 = ssub.s32 %s29, %s41
      %s43 = ssub.s32 %s30, %s37
      %s44 = sor.u32 %s42, %s43
      %p45 = scmp.eq.s32.totalorder %s44, 0
      %s47 = sadd.s32 %s46, 1
      %s48 = scalar_select %p45, %s46, %s47
      %p51 = pneg %p45
      %p52 = scmp.eq.s32.totalorder %s22, 1
      %p53 = por %p51, %p52
      %p54 = scmp.ne.s32.totalorder %s46, %s49
      %p55 = scmp.eq.s32.totalorder %s22, 0
      %p56 = por %p54, %p55
      %p57 = scmp.ne.s32.totalorder %s46, %s49
      %p58 = scmp.eq.s32.totalorder %s27, 1
      %p59 = por %p57, %p58
      %p60 = scmp.ne.s32.totalorder %s49, %s50
      %p61 = scmp.eq.s32.totalorder %s27, 0
      %p62 = por %p60, %p61
      %p63 = scmp.ne.s32.totalorder %s49, %s50
      %p64 = scmp.eq.s32.totalorder %s28, 1
      %p65 = por %p63, %p64
      %p67 = scmp.ne.s32.totalorder %s50, %s66
      %p68 = scmp.eq.s32.totalorder %s28, 0
      %p69 = por %p67, %p68
      %s71 = sadd.s32 %s70, 1
      %p74 = scmp.eq.s32.totalorder %s22, 1
      %p75 = scmp.ne.s32.totalorder %s70, %s72
      %p76 = scmp.eq.s32.totalorder %s22, 0
      %p77 = por %p75, %p76
      %p78 = scmp.ne.s32.totalorder %s70, %s72
      %p79 = scmp.eq.s32.totalorder %s27, 1
      %p80 = por %p78, %p79
      %p81 = scmp.ne.s32.totalorder %s72, %s73
      %p82 = scmp.eq.s32.totalorder %s27, 0
      %p83 = por %p81, %p82
      %p84 = scmp.ne.s32.totalorder %s72, %s73
      %p85 = scmp.eq.s32.totalorder %s28, 1
      %p86 = por %p84, %p85
      %p88 = scmp.ne.s32.totalorder %s73, %s87
      %p89 = scmp.eq.s32.totalorder %s28, 0
      %p90 = por %p88, %p89
      %s92 = sadd.s32 %s91, 1
      %p95 = scmp.eq.s32.totalorder %s22, 1
      %p96 = scmp.ne.s32.totalorder %s91, %s93
      %p97 = scmp.eq.s32.totalorder %s22, 0
      %p98 = por %p96, %p97
      %p99 = scmp.ne.s32.totalorder %s91, %s93
      %p100 = scmp.eq.s32.totalorder %s27, 1
      %p101 = por %p99, %p100
      %p102 = scmp.ne.s32.totalorder %s93, %s94
      %p103 = scmp.eq.s32.totalorder %s27, 0
      %p104 = por %p102, %p103
      %p105 = scmp.ne.s32.totalorder %s93, %s94
      %p106 = scmp.eq.s32.totalorder %s28, 1
      %p107 = por %p105, %p106
      %p109 = scmp.ne.s32.totalorder %s94, %s108
      %p110 = scmp.eq.s32.totalorder %s28, 0
      %p111 = por %p109, %p110
      %s113 = sadd.s32 %s112, 1
      %p116 = scmp.eq.s32.totalorder %s22, 1
      %p117 = scmp.ne.s32.totalorder %s112, %s114
      %p118 = scmp.eq.s32.totalorder %s22, 0
      %p119 = por %p117, %p118
      %p120 = scmp.ne.s32.totalorder %s112, %s114
      %p121 = scmp.eq.s32.totalorder %s27, 1
      %p122 = por %p120, %p121
      %p123 = scmp.ne.s32.totalorder %s114, %s115
      %p124 = scmp.eq.s32.totalorder %s27, 0
      %p125 = por %p123, %p124
      %p126 = scmp.ne.s32.totalorder %s114, %s115
      %p127 = scmp.eq.s32.totalorder %s28, 1
      %p128 = por %p126, %p127
      %p130 = scmp.ne.s32.totalorder %s115, %s129
      %p131 = scmp.eq.s32.totalorder %s28, 0
      %p132 = por %p130, %p131
      %s134 = sadd.s32 %s133, 1
      %p137 = scmp.eq.s32.totalorder %s22, 1
      %p138 = scmp.ne.s32.totalorder %s133, %s135
      %p139 = scmp.eq.s32.totalorder %s22, 0
      %p140 = por %p138, %p139
      %p141 = scmp.ne.s32.totalorder %s133, %s135
      %p142 = scmp.eq.s32.totalorder %s27, 1
      %p143 = por %p141, %p142
      %p144 = scmp.ne.s32.totalorder %s135, %s136
      %p145 = scmp.eq.s32.totalorder %s27, 0
      %p146 = por %p144, %p145
      %p147 = scmp.ne.s32.totalorder %s135, %s136
      %p148 = scmp.eq.s32.totalorder %s28, 1
      %p149 = por %p147, %p148
      %p151 = scmp.ne.s32.totalorder %s136, %s150
      %p152 = scmp.eq.s32.totalorder %s28, 0
      %p153 = por %p151, %p152
      %s155 = sadd.s32 %s154, 1
      %p158 = scmp.eq.s32.totalorder %s22, 1
      %p159 = scmp.ne.s32.totalorder %s154, %s156
      %p160 = scmp.eq.s32.totalorder %s22, 0
      %p161 = por %p159, %p160
      %p162 = scmp.ne.s32.totalorder %s154, %s156
      %p163 = scmp.eq.s32.totalorder %s27, 1
      %p164 = por %p162, %p163
      %p165 = scmp.ne.s32.totalorder %s156, %s157
      %p166 = scmp.eq.s32.totalorder %s27, 0
      %p167 = por %p165, %p166
      %p168 = scmp.ne.s32.totalorder %s156, %s157
      %p169 = scmp.eq.s32.totalorder %s28, 1
      %p170 = por %p168, %p169
      %p172 = scmp.ne.s32.totalorder %s157, %s171
      %p173 = scmp.eq.s32.totalorder %s28, 0
      %p174 = por %p172, %p173
      %s176 = sadd.s32 %s175, 1
      %p179 = scmp.eq.s32.totalorder %s22, 1
      %p180 = scmp.ne.s32.totalorder %s175, %s177
      %p181 = scmp.eq.s32.totalorder %s22, 0
      %p182 = por %p180, %p181
      %p183 = scmp.ne.s32.totalorder %s175, %s177
      %p184 = scmp.eq.s32.totalorder %s27, 1
      %p185 = por %p183, %p184
      %p186 = scmp.ne.s32.totalorder %s177, %s178
      %p187 = scmp.eq.s32.totalorder %s27, 0
      %p188 = por %p186, %p187
      %p189 = scmp.ne.s32.totalorder %s177, %s178
      %p190 = scmp.eq.s32.totalorder %s28, 1
      %p191 = por %p189, %p190
      %p193 = scmp.ne.s32.totalorder %s178, %s192
      %p194 = scmp.eq.s32.totalorder %s28, 0
      %p195 = por %p193, %p194
      %s197 = sadd.s32 %s196, 1
      %p200 = scmp.eq.s32.totalorder %s22, 1
      %p201 = scmp.ne.s32.totalorder %s196, %s198
      %p202 = scmp.eq.s32.totalorder %s22, 0
      %p203 = por %p201, %p202
      %p204 = scmp.ne.s32.totalorder %s196, %s198
      %p205 = scmp.eq.s32.totalorder %s27, 1
      %p206 = por %p204, %p205
      %p207 = scmp.ne.s32.totalorder %s198, %s199
      %p208 = scmp.eq.s32.totalorder %s27, 0
      %p209 = por %p207, %p208
      %p210 = scmp.ne.s32.totalorder %s198, %s199
      %p211 = scmp.eq.s32.totalorder %s28, 1
      %p212 = por %p210, %p211
      %p214 = scmp.ne.s32.totalorder %s199, %s213
      %p215 = scmp.eq.s32.totalorder %s28, 0
      %p216 = por %p214, %p215
      %s217 = ssub.s32 %s29, %s41
      %s218 = ssub.s32 %s30, %s37
      %s219 = sor.u32 %s217, %s218
      %p220 = scmp.eq.s32.totalorder %s219, 0
      %s222 = sadd.s32 %s221, 1
      %s223 = scalar_select %p220, %s221, %s222
      %p226 = pneg %p220
      %p227 = scmp.eq.s32.totalorder %s22, 1
      %p228 = por %p226, %p227
      %p229 = scmp.ne.s32.totalorder %s221, %s224
      %p230 = scmp.eq.s32.totalorder %s22, 0
      %p231 = por %p229, %p230
      %p232 = scmp.ne.s32.totalorder %s221, %s224
      %p233 = scmp.eq.s32.totalorder %s27, 1
      %p234 = por %p232, %p233
      %p235 = scmp.ne.s32.totalorder %s224, %s225
      %p236 = scmp.eq.s32.totalorder %s27, 0
      %p237 = por %p235, %p236
      %p238 = scmp.ne.s32.totalorder %s224, %s225
      %p239 = scmp.eq.s32.totalorder %s28, 1
      %p240 = por %p238, %p239
      %p242 = scmp.ne.s32.totalorder %s225, %s241
      %p243 = scmp.eq.s32.totalorder %s28, 0
      %p244 = por %p242, %p243
      %p245 = scmp.le.s32.totalorder 1, %s22
      %p246 = scmp.lt.s32.totalorder %s22, 3
      %p247 = pnand %p245, %p246
      %p248 = pneg %p247
      // Predicated region
      $region9: #{hawk_forward.1} parent=5 // pred_check
        _
      $region10: #{hawk_forward.1} parent=5 // pred_check_branch
        %250 = sbr.rel (%p247) target = $region12
      $region11: #{hawk_forward.1} parent=5 // pred_region
        %s251 = ssub.s32 %s22, 1
        // Predicated region
        $region13: #{hawk_forward.1} parent=11 // pred_check
          %p252 = pneg %p83
        $region14: #{hawk_forward.1} parent=11 // pred_check_branch
          %254 = sbr.rel (%p252) target = $region16
        $region15: #{hawk_forward.1} parent=11 // pred_region
          _
        $region16: #{hawk_forward.1} parent=11 // pred_fallthru
          _
        // Predicated region
        $region17: #{hawk_forward.1} parent=11 // pred_check
          %p255 = pneg %p104
        $region18: #{hawk_forward.1} parent=11 // pred_check_branch
          %257 = sbr.rel (%p255) target = $region20
        $region19: #{hawk_forward.1} parent=11 // pred_region
          _
        $region20: #{hawk_forward.1} parent=11 // pred_fallthru
          _
        // Predicated region
        $region21: #{hawk_forward.1} parent=11 // pred_check
          %p258 = pneg %p125
        $region22: #{hawk_forward.1} parent=11 // pred_check_branch
          %260 = sbr.rel (%p258) target = $region24
        $region23: #{hawk_forward.1} parent=11 // pred_region
          _
        $region24: #{hawk_forward.1} parent=11 // pred_fallthru
          _
        // Predicated region
        $region25: #{hawk_forward.1} parent=11 // pred_check
          %p261 = pneg %p146
        $region26: #{hawk_forward.1} parent=11 // pred_check_branch
          %263 = sbr.rel (%p261) target = $region28
        $region27: #{hawk_forward.1} parent=11 // pred_region
          %s265 = ssub.s32 256, 256
          %266 = vsyncadd [#allocation11], %s265
          %s267 = sshll.u32 [#allocation10], 4
          %s268 = int_to_ptr.vmem [resolvable:$true] %s267
          %273 = dma.hbm_to_vmem [thread:$0]  %s4, 256, %s268, [#allocation11], 64, 64, 4
        $region28: #{hawk_forward.1} parent=11 // pred_fallthru
          _
        // Predicated region
        $region29: #{hawk_forward.1} parent=11 // pred_check
          %p274 = pneg %p167
        $region30: #{hawk_forward.1} parent=11 // pred_check_branch
          %276 = sbr.rel (%p274) target = $region32
        $region31: #{hawk_forward.1} parent=11 // pred_region
          _
        $region32: #{hawk_forward.1} parent=11 // pred_fallthru
          _
        // Predicated region
        $region33: #{hawk_forward.1} parent=11 // pred_check
          %p277 = pneg %p188
        $region34: #{hawk_forward.1} parent=11 // pred_check_branch
          %279 = sbr.rel (%p277) target = $region36
        $region35: #{hawk_forward.1} parent=11 // pred_region
          %s281 = ssub.s32 16, 16
          %282 = vsyncadd [#allocation11], %s281
          %s284 = sshll.u32 [#allocation12], 4
          %s285 = int_to_ptr.vmem [resolvable:$true] %s284
          %287 = dma.hbm_to_vmem [thread:$0]  %s6, 16, %s285, [#allocation11]
        $region36: #{hawk_forward.1} parent=11 // pred_fallthru
          _
        // Predicated region
        $region37: #{hawk_forward.1} parent=11 // pred_check
          %p288 = pneg %p209
        $region38: #{hawk_forward.1} parent=11 // pred_check_branch
          %290 = sbr.rel (%p288) target = $region40
        $region39: #{hawk_forward.1} parent=11 // pred_region
          %s292 = ssub.s32 256, 256
          %293 = vsyncadd [#allocation14], %s292
          %s294 = sshll.u32 [#allocation13], 4
          %s295 = int_to_ptr.vmem [resolvable:$true] %s294
          %300 = dma.hbm_to_vmem [thread:$0]  %s7, 256, %s295, [#allocation14], 64, 64, 4
        $region40: #{hawk_forward.1} parent=11 // pred_fallthru
          _
      $region12: #{hawk_forward.1} parent=5 // pred_fallthru
        _
      %p301 = scmp.lt.s32.totalorder %s22, 2
      // Predicated region
      $region41: #{hawk_forward.1} parent=5 // pred_check
        %p302 = pneg %p301
      $region42: #{hawk_forward.1} parent=5 // pred_check_branch
        %304 = sbr.rel (%p302) target = $region44
      $region43: #{hawk_forward.1} parent=5 // pred_region
        // Predicated region
        $region45: #{hawk_forward.1} parent=43 // pred_check
          %p305 = pneg %p56
        $region46: #{hawk_forward.1} parent=43 // pred_check_branch
          %307 = sbr.rel (%p305) target = $region48
        $region47: #{hawk_forward.1} parent=43 // pred_region
          %s308 = sand.u32 %s46, 1
          %s309 = scalar_lea.sflag [#allocation8], %s308
          %s310 = sand.u32 %s46, 1
          %s311 = smul.addr %s310, 16
          %s312 = scalar_lea.vmem [#allocation7], %s311
          %s313 = smul.u32 2, %s30
          %s315 = ssub.s32 256, 256
          %316 = vsyncadd %s309, %s315
          %s317 = smul.addr %s29, 2
          %s318 = sadd.s32 %s313, %s317
          %s319 = smul.addr %s318, 128
          %s320 = scalar_lea.hbm %s0, %s319
          %s321 = sshll.u32 %s312, 4
          %s322 = int_to_ptr.vmem [resolvable:$true] %s321
          %327 = dma.hbm_to_vmem [thread:$0]  %s320, 256, %s322, %s309, 128, 128, 8
        $region48: #{hawk_forward.1} parent=43 // pred_fallthru
          _
      $region44: #{hawk_forward.1} parent=5 // pred_fallthru
        _
      %p328 = scmp.le.s32.totalorder 1, %s22
      %p329 = scmp.lt.s32.totalorder %s22, 3
      %p330 = pnand %p328, %p329
      %p331 = pneg %p330
      // Predicated region
      $region49: #{hawk_forward.1} parent=5 // pred_check
        _
      $region50: #{hawk_forward.1} parent=5 // pred_check_branch
        %333 = sbr.rel (%p330) target = $region52
      $region51: #{hawk_forward.1} parent=5 // pred_region
        %s334 = ssub.s32 %s22, 1
        %s335 = sand.u32 %s49, 1
        %s336 = scalar_lea.sflag [#allocation8], %s335
        %s337 = sand.u32 %s49, 1
        %s338 = smul.addr %s337, 16
        %s339 = scalar_lea.vmem [#allocation7], %s338
        // Predicated region
        $region53: #{hawk_forward.1} parent=51 // pred_check
          %p340 = pneg %p62
        $region54: #{hawk_forward.1} parent=51 // pred_check_branch
          %342 = sbr.rel (%p340) target = $region56
        $region55: #{hawk_forward.1} parent=51 // pred_region
          %343 = dma.done %s336, 256
        $region56: #{hawk_forward.1} parent=51 // pred_fallthru
          _
        // Predicated region
        $region57: #{hawk_forward.1} parent=51 // pred_check
          %p344 = pneg %p146
        $region58: #{hawk_forward.1} parent=51 // pred_check_branch
          %346 = sbr.rel (%p344) target = $region60
        $region59: #{hawk_forward.1} parent=51 // pred_region
          %347 = dma.done [#allocation11], 256
        $region60: #{hawk_forward.1} parent=51 // pred_fallthru
          _
        // Predicated region
        $region61: #{hawk_forward.1} parent=51 // pred_check
          %p348 = pneg %p188
        $region62: #{hawk_forward.1} parent=51 // pred_check_branch
          %350 = sbr.rel (%p348) target = $region64
        $region63: #{hawk_forward.1} parent=51 // pred_region
          %351 = dma.done [#allocation11], 16
        $region64: #{hawk_forward.1} parent=51 // pred_fallthru
          _
        // Predicated region
        $region65: #{hawk_forward.1} parent=51 // pred_check
          %p352 = pneg %p209
        $region66: #{hawk_forward.1} parent=51 // pred_check_branch
          %354 = sbr.rel (%p352) target = $region68
        $region67: #{hawk_forward.1} parent=51 // pred_region
          %355 = dma.done [#allocation14], 256
        $region68: #{hawk_forward.1} parent=51 // pred_fallthru
          _
        %s356 = sand.u32 %s49, 1
        %s357 = scalar_lea.sflag [#allocation8], %s356
        %s358 = sand.u32 %s49, 1
        %s359 = smul.addr %s358, 16
        %s360 = scalar_lea.vmem [#allocation7], %s359
        %p361 = pneg %p62
        %p362 = pneg %p59
        %p363 = pneg %p83
        %p364 = pneg %p80
        %p365 = pneg %p104
        %p366 = pneg %p101
        %p367 = pneg %p125
        %p368 = pneg %p122
        %p369 = pneg %p146
        %p370 = pneg %p143
        %p371 = pneg %p167
        %p372 = pneg %p164
        %p373 = pneg %p188
        %p374 = pneg %p185
        %p375 = pneg %p209
        %p376 = pneg %p206
        %p377 = pneg %p237
        %p378 = pneg %p234
        %s379 = sand.u32 %s224, 1
        %s380 = scalar_lea.sflag [#allocation9], %s379
        %s381 = sand.u32 %s224, 1
        %s382 = smul.addr %s381, 16
        %s383 = scalar_lea.vmem [#allocation15], %s382
        %s384 = smul.u32 2, %s32
        %s385 = smul.u32 2, %s32
        %p387 = scmp.eq.s32.totalorder %s32, 0
        // Predicated region
        $region69: #{hawk_forward.1} parent=51 // pred_check
          %p388 = pneg %p387
        $region70: #{hawk_forward.1} parent=51 // pred_check_branch
          %390 = sbr.rel (%p388) target = $region72
        $region71: #{hawk_forward.1} parent=51 // pred_region
          %vm391 = vcmask 253952
          %392 = vst.msk [vmem:[#allocation6] sm:$0x1] %vm391, 0.0
          %vm393 = vcmask 256000
          %394 = vst.msk [vmem:[#allocation2 + $0x5] sm:$0x7] %vm393, 0.0
        $region72: #{hawk_forward.1} parent=51 // pred_fallthru
          _
        %v395 = vld [vmem:[%s339] sm:$0xff]
        %v396 = vld [vmem:[%s339 + $0x8] sm:$0xff]
        %v397 = vpack.c.bf16 %v396, %v395
        %v398 = vld [vmem:[%s1] sm:$0xf]
        %v399 = vld [vmem:[%s1 + $0x4] sm:$0xf]
        %v400 = vld [vmem:[%s1 + $0x8] sm:$0xf]
        %v401 = vld [vmem:[%s1 + $0xc] sm:$0xf]
        %v406 = vunpack.c.l.b16 %v398
        %v407 = vunpack.c.l.b16 %v399
        %v408 = vunpack.c.l.b16 %v400
        %v409 = vunpack.c.l.b16 %v401
        %v410 = vpack.c.b16 %v407, %v406
        %v411 = vpack.c.b16 %v409, %v408
        %vm414 = vcmask 261120
        %v416 = vsel %vm414, %v397, 0
        %418 = vmatprep.subr.bf16.mxu0 0
        %419 = vmatpush1.bf16.msra.mxu0 %v410
        %420 = vmatprep.subr.bf16.mxu0 0
        %421 = vmatpush1.bf16.msra.mxu0 %v411
        %422 = vmatprep.subr.bf16.mxu0 0
        %423 = vmatpush1.bf16.msra.mxu0 0
        %424 = vmatprep.subr.bf16.mxu0 0
        %425 = vmatpush1.bf16.msra.mxu0 0
        %426 = vmatprep.subr.bf16.mxu0 0
        %427 = vmatpush1.bf16.msra.mxu0 0
        %428 = vmatprep.subr.bf16.mxu0 0
        %429 = vmatpush1.bf16.msra.mxu0 0
        %430 = vmatprep.subr.bf16.mxu0 0
        %431 = vmatpush1.bf16.msra.mxu0 0
        %432 = vmatprep.subr.bf16.mxu0 0
        %433 = vmatpush1.bf16.msra.mxu0 0
        %434 = vmatprep.subr.bf16.mxu0 0
        %435 = vmatpush1.bf16.msra.mxu0 0
        %436 = vmatprep.subr.bf16.mxu0 0
        %437 = vmatpush1.bf16.msra.mxu0 0
        %438 = vmatprep.subr.bf16.mxu0 0
        %439 = vmatpush1.bf16.msra.mxu0 0
        %440 = vmatprep.subr.bf16.mxu0 0
        %441 = vmatpush1.bf16.msra.mxu0 0
        %442 = vmatprep.subr.bf16.mxu0 0
        %443 = vmatpush1.bf16.msra.mxu0 0
        %444 = vmatprep.subr.bf16.mxu0 0
        %445 = vmatpush1.bf16.msra.mxu0 0
        %446 = vmatprep.subr.bf16.mxu0 0
        %447 = vmatpush1.bf16.msra.mxu0 0
        %448 = vmatprep.subr.bf16.mxu0 0
        %449 = vmatpush1.bf16.msra.mxu0 0
        %450 = vmatprep.mubr.bf16.mxu0 0
        %451 = vmatmul.mubr.bf16.gmra.mrb[0].mxu0 %v416
        %v452 = vpop.f32.mrb[0].mxu0
        %v453 = vadd.f32 0.0, %v452
        %v454 = vpop.f32.mrb[0].mxu0
        %v455 = vpop.f32.mrb[0].mxu0
        %v456 = vadd.f32 0.0, %v455
        %v457 = vpop.f32.mrb[0].mxu0
        %458 = vdwg.mxu0
        %v459 = vmul.f32 %v453, %v453
        %v460 = vmul.f32 %v456, %v456
        %v461 = vmul.f32 %v453, %v459
        %v462 = vmul.f32 %v456, %v460
        %v463 = vmul.f32 %v461, 0.044715
        %v464 = vmul.f32 %v462, 0.044715
        %v465 = vadd.f32 %v453, %v463
        %v466 = vadd.f32 %v456, %v464
        %v467 = vmul.f32 %v465, 0.7978846
        %v468 = vmul.f32 %v466, 0.7978846
        %v469 = vtanh.pop %v467
        %v470 = vtanh.pop %v468
        %v471 = vadd.f32 %v469, 1.0
        %v472 = vadd.f32 %v470, 1.0
        %v473 = vmul.f32 %v471, 0.5
        %v474 = vmul.f32 %v472, 0.5
        %v475 = vmul.f32 %v453, %v473
        %v476 = vmul.f32 %v456, %v474
        %v477 = vpack.c.bf16 %v476, %v475
        %478 = vst.msk [vmem:[#allocation5] sm:$0xff] %vm414, %v477
        %481 = vrot.lane.b32.xlu0 %v453, 96
        %v482 = vpop.permute.xlu0 %481
        %483 = vrot.lane.b32.xlu0 %v456, 96
        %v484 = vpop.permute.xlu0 %483
        %487 = vst.msk [vmem:[#allocation2 + $0x8] sm:$0xff] %vm414, %v482
        %488 = vst.msk [vmem:[#allocation2 + $0x10] sm:$0xff] %vm414, %v484
        %v489 = vld [vmem:[%s2 + $0x3] sm:$0x1]
        %v490 = vlaneseq
        %v491 = vshrl.u32 %v490, 7
        %v492 = vsub.s32 0, %v491
        %v493 = vrot.slane %v489, %v492
        %495 = vrot.lane.b32.xlu0 %v493, 32
        %v496 = vpop.permute.xlu0 %495
        %v498 = vmul.f32 %v453, %v496
        %v499 = vmul.f32 %v456, %v496
        %v500 = vld [vmem:[%s3] sm:$0x1]
        %v502 = vlaneseq
        %v503 = vshrl.u32 %v502, 7
        %v504 = vsub.s32 0, %v503
        %v505 = vrot.slane %v500, %v504
        %506 = vrot.lane.b32.xlu0 %v505, 32
        %v507 = vpop.permute.xlu0 %506
        %v509 = vadd.f32 %v498, %v507
        %v510 = vadd.f32 %v499, %v507
        %v511 = vld [vmem:[%s2] sm:$0x1]
        %v512 = vld [vmem:[#allocation2 + $0x5] sm:$0xff]
        %v513 = vld [vmem:[#allocation2 + $0xd] sm:$0xff]
        %v514 = vlaneseq
        %v515 = vshrl.u32 %v514, 7
        %v516 = vsub.s32 0, %v515
        %v517 = vrot.slane %v511, %v516
        %v518 = vmul.f32 %v517, %v512
        %v519 = vmul.f32 %v517, %v513
        %522 = vrot.lane.b32.xlu0 %v518, 32
        %v523 = vpop.permute.xlu0 %522
        %524 = vrot.lane.b32.xlu0 %v519, 32
        %v525 = vpop.permute.xlu0 %524
        %v528 = vadd.f32 %v509, %v523
        %v529 = vadd.f32 %v510, %v525
        %v530 = vld [vmem:[%s2 + $0x1] sm:$0x1]
        %v531 = vld [vmem:[#allocation2 + $0x6] sm:$0xff]
        %v532 = vld [vmem:[#allocation2 + $0xe] sm:$0xff]
        %v533 = vlaneseq
        %v534 = vshrl.u32 %v533, 7
        %v535 = vsub.s32 0, %v534
        %v536 = vrot.slane %v530, %v535
        %v537 = vmul.f32 %v536, %v531
        %v538 = vmul.f32 %v536, %v532
        %541 = vrot.lane.b32.xlu0 %v537, 32
        %v542 = vpop.permute.xlu0 %541
        %543 = vrot.lane.b32.xlu0 %v538, 32
        %v544 = vpop.permute.xlu0 %543
        %v547 = vadd.f32 %v528, %v542
        %v548 = vadd.f32 %v529, %v544
        %v549 = vld [vmem:[%s2 + $0x2] sm:$0x1]
        %v550 = vld [vmem:[#allocation2 + $0x7] sm:$0xff]
        %v551 = vld [vmem:[#allocation2 + $0xf] sm:$0xff]
        %v552 = vlaneseq
        %v553 = vshrl.u32 %v552, 7
        %v554 = vsub.s32 0, %v553
        %v555 = vrot.slane %v549, %v554
        %v556 = vmul.f32 %v555, %v550
        %v557 = vmul.f32 %v555, %v551
        %560 = vrot.lane.b32.xlu0 %v556, 32
        %v561 = vpop.permute.xlu0 %560
        %562 = vrot.lane.b32.xlu0 %v557, 32
        %v563 = vpop.permute.xlu0 %562
        %v566 = vadd.f32 %v547, %v561
        %v567 = vadd.f32 %v548, %v563
        %vm568 = vcmask 261125
        %569 = vst.msk [vmem:[#allocation2] sm:$0xe0] %vm568, %v484
        %v570 = vpack.c.bf16 %v567, %v566
        %v571 = vld [vmem:[#allocation10] sm:$0xf]
        %v572 = vld [vmem:[#allocation10 + $0x4] sm:$0xf]
        %v573 = vld [vmem:[#allocation10 + $0x8] sm:$0xf]
        %v574 = vld [vmem:[#allocation10 + $0xc] sm:$0xf]
        %v575 = vld [vmem:[%s5] sm:$0x1]
        %v577 = vlaneseq
        %v578 = vshrl.u32 %v577, 7
        %v579 = vsub.s32 0, %v578
        %v580 = vrot.slane %v575, %v579
        %583 = vrot.lane.b32.xlu0 %v570, 96
        %v584 = vpop.permute.xlu0 %583
        %v589 = vunpack.c.l.b16 %v571
        %v590 = vunpack.c.l.b16 %v572
        %v591 = vunpack.c.l.b16 %v573
        %v592 = vunpack.c.l.b16 %v574
        %v593 = vpack.c.b16 %v590, %v589
        %v594 = vpack.c.b16 %v592, %v591
        %v598 = vsel %vm414, %v584, 0
        %600 = vmatprep.subr.bf16.mxu0 0
        %601 = vmatpush1.bf16.msra.mxu0 %v593
        %602 = vmatprep.subr.bf16.mxu0 0
        %603 = vmatpush1.bf16.msra.mxu0 %v594
        %604 = vmatprep.subr.bf16.mxu0 0
        %605 = vmatpush1.bf16.msra.mxu0 0
        %606 = vmatprep.subr.bf16.mxu0 0
        %607 = vmatpush1.bf16.msra.mxu0 0
        %608 = vmatprep.subr.bf16.mxu0 0
        %609 = vmatpush1.bf16.msra.mxu0 0
        %610 = vmatprep.subr.bf16.mxu0 0
        %611 = vmatpush1.bf16.msra.mxu0 0
        %612 = vmatprep.subr.bf16.mxu0 0
        %613 = vmatpush1.bf16.msra.mxu0 0
        %614 = vmatprep.subr.bf16.mxu0 0
        %615 = vmatpush1.bf16.msra.mxu0 0
        %616 = vmatprep.subr.bf16.mxu0 0
        %617 = vmatpush1.bf16.msra.mxu0 0
        %618 = vmatprep.subr.bf16.mxu0 0
        %619 = vmatpush1.bf16.msra.mxu0 0
        %620 = vmatprep.subr.bf16.mxu0 0
        %621 = vmatpush1.bf16.msra.mxu0 0
        %622 = vmatprep.subr.bf16.mxu0 0
        %623 = vmatpush1.bf16.msra.mxu0 0
        %624 = vmatprep.subr.bf16.mxu0 0
        %625 = vmatpush1.bf16.msra.mxu0 0
        %626 = vmatprep.subr.bf16.mxu0 0
        %627 = vmatpush1.bf16.msra.mxu0 0
        %628 = vmatprep.subr.bf16.mxu0 0
        %629 = vmatpush1.bf16.msra.mxu0 0
        %630 = vmatprep.subr.bf16.mxu0 0
        %631 = vmatpush1.bf16.msra.mxu0 0
        %632 = vmatprep.mubr.bf16.mxu0 0
        %633 = vmatmul.mubr.bf16.gmra.mrb[0].mxu0 %v598
        %v634 = vpop.f32.mrb[0].mxu0
        %v635 = vadd.f32 %v580, %v634
        %v636 = vpop.f32.mrb[0].mxu0
        %v637 = vpop.f32.mrb[0].mxu0
        %v638 = vadd.f32 %v580, %v637
        %v639 = vpop.f32.mrb[0].mxu0
        %640 = vdwg.mxu0
        %v641 = vld [vmem:[#allocation12] sm:$0x1]
        %v642 = vxor.u32 %v635, 2147483648
        %v643 = vxor.u32 %v638, 2147483648
        %v644 = vmul.f32 %v642, 1.442695
        %v645 = vpow.pop %v644
        %v646 = vmul.f32 %v643, 1.442695
        %v647 = vpow.pop %v646
        %v648 = vadd.f32 %v645, 1.0
        %v649 = vadd.f32 %v647, 1.0
        %v650 = vrcp.pop %v648
        %v651 = vmul.f32 1.0, %v650
        %v652 = vrcp.pop %v649
        %v653 = vmul.f32 1.0, %v652
        %v655 = vlaneseq
        %v656 = vshrl.u32 %v655, 7
        %v657 = vsub.s32 0, %v656
        %v658 = vrot.slane %v641, %v657
        %v660 = vmul.f32 %v658, %v651
        %v661 = vmul.f32 %v658, %v653
        %v662 = vmul.f32 %v660, 1.442695
        %v663 = vpow.pop %v662
        %v664 = vmul.f32 %v661, 1.442695
        %v665 = vpow.pop %v664
        %v666 = vmul.f32 %v663, %v663
        %v667 = vmul.f32 %v665, %v665
        %v668 = vsub.f32 1.0, %v666
        %v669 = vsub.f32 1.0, %v667
        %v670 = vadd.f32 %v668, 1e-06
        %v671 = vadd.f32 %v669, 1e-06
        %v672 = vrsqrt.pop %v670
        %v673 = vmul.f32 %v670, %v672
        %vm674 = vcmp.eq.f32.partialorder %v670, inf
        %v675 = vsel %vm674, %v670, %v673
        %vm676 = vcmp.eq.f32.partialorder %v670, 0.0
        %v677 = vand.u32 %v670, 2147483648
        %v678 = vsel %vm676, %v677, %v675
        %v679 = vrsqrt.pop %v671
        %v680 = vmul.f32 %v671, %v679
        %vm681 = vcmp.eq.f32.partialorder %v671, inf
        %v682 = vsel %vm681, %v671, %v680
        %vm683 = vcmp.eq.f32.partialorder %v671, 0.0
        %v684 = vand.u32 %v671, 2147483648
        %v685 = vsel %vm683, %v684, %v682
        %688 = vrot.lane.b32.xlu0 %v651, 96
        %v689 = vpop.permute.xlu0 %688
        %690 = vrot.lane.b32.xlu0 %v653, 96
        %v691 = vpop.permute.xlu0 %690
        %v694 = vmul.f32 %v678, %v689
        %v695 = vmul.f32 %v685, %v691
        %698 = vrot.lane.b32.xlu0 %v566, 96
        %v699 = vpop.permute.xlu0 %698
        %700 = vrot.lane.b32.xlu0 %v567, 96
        %v701 = vpop.permute.xlu0 %700
        %v704 = vmul.f32 %v694, %v699
        %v705 = vmul.f32 %v695, %v701
        %706 = vst.msk [vmem:[#allocation3] sm:$0xff] %vm414, %v663
        %707 = vst.msk [vmem:[#allocation3 + $0x8] sm:$0xff] %vm414, %v665
        %708 = vst.msk [vmem:[#allocation4] sm:$0xff] %vm414, %v704
        %709 = vst.msk [vmem:[#allocation4 + $0x8] sm:$0xff] %vm414, %v705
        %v710 = vld [vmem:[#allocation6] sm:$0x1]
        %v711 = vld [vmem:[#allocation3] sm:$0xff]
        %v712 = vld [vmem:[#allocation4] sm:$0xff]
        %v713 = vmul.f32 %v711, %v710
        %v714 = vadd.f32 %v713, %v712
        %v716 = vrot.slane %v714, 7
        %v718 = vmul.f32 %v711, %v716
        %v719 = vadd.f32 %v718, %v712
        %v721 = vrot.slane %v719, 7
        %v723 = vmul.f32 %v711, %v721
        %v724 = vadd.f32 %v723, %v712
        %v726 = vrot.slane %v724, 7
        %v728 = vmul.f32 %v711, %v726
        %v729 = vadd.f32 %v728, %v712
        %v731 = vrot.slane %v729, 7
        %v733 = vmul.f32 %v711, %v731
        %v734 = vadd.f32 %v733, %v712
        %v736 = vrot.slane %v734, 7
        %v738 = vmul.f32 %v711, %v736
        %v739 = vadd.f32 %v738, %v712
        %v741 = vrot.slane %v739, 7
        %v743 = vmul.f32 %v711, %v741
        %v744 = vadd.f32 %v743, %v712
        %v746 = vrot.slane %v744, 7
        %v748 = vmul.f32 %v711, %v746
        %v749 = vadd.f32 %v748, %v712
        %vm750 = vcmask 1040384
        %v751 = vsel %vm750, %v714, %v719
        %vm752 = vcmask 1041408
        %v753 = vsel %vm752, %v751, %v724
        %vm754 = vcmask 1042432
        %v755 = vsel %vm754, %v753, %v729
        %vm756 = vcmask 1043456
        %v757 = vsel %vm756, %v755, %v734
        %vm758 = vcmask 1044480
        %v759 = vsel %vm758, %v757, %v739
        %vm760 = vcmask 1045504
        %v761 = vsel %vm760, %v759, %v744
        %vm762 = vcmask 1046528
        %v763 = vsel %vm762, %v761, %v749
        %764 = vst.msk [vmem:[#allocation4] sm:$0xff] %vm414, %v763
        %s765 = scalar_lea.vmem [#allocation3], 8
        %v766 = vld [vmem:[%s765] sm:$0xff]
        %s767 = scalar_lea.vmem [#allocation4], 8
        %v768 = vld [vmem:[%s767] sm:$0xff]
        %v770 = vrot.slane %v749, 7
        %v772 = vmul.f32 %v766, %v770
        %v773 = vadd.f32 %v772, %v768
        %v775 = vrot.slane %v773, 7
        %v777 = vmul.f32 %v766, %v775
        %v778 = vadd.f32 %v777, %v768
        %v780 = vrot.slane %v778, 7
        %v782 = vmul.f32 %v766, %v780
        %v783 = vadd.f32 %v782, %v768
        %v785 = vrot.slane %v783, 7
        %v787 = vmul.f32 %v766, %v785
        %v788 = vadd.f32 %v787, %v768
        %v790 = vrot.slane %v788, 7
        %v792 = vmul.f32 %v766, %v790
        %v793 = vadd.f32 %v792, %v768
        %v795 = vrot.slane %v793, 7
        %v797 = vmul.f32 %v766, %v795
        %v798 = vadd.f32 %v797, %v768
        %v800 = vrot.slane %v798, 7
        %v802 = vmul.f32 %v766, %v800
        %v803 = vadd.f32 %v802, %v768
        %v805 = vrot.slane %v803, 7
        %v807 = vmul.f32 %v766, %v805
        %v808 = vadd.f32 %v807, %v768
        %v809 = vsel %vm750, %v773, %v778
        %v810 = vsel %vm752, %v809, %v783
        %v811 = vsel %vm754, %v810, %v788
        %v812 = vsel %vm756, %v811, %v793
        %v813 = vsel %vm758, %v812, %v798
        %v814 = vsel %vm760, %v813, %v803
        %v815 = vsel %vm762, %v814, %v808
        %816 = vst.msk [vmem:[%s767] sm:$0xff] %vm414, %v815
        %vm817 = vcmask 261127
        %818 = vst.msk [vmem:[#allocation6 - $0x7] sm:$0x80] %vm817, %v808
        %v819 = vld [vmem:[#allocation5] sm:$0xff]
        %v820 = vunpack.c.l.bf16 %v819
        %v821 = vunpack.c.h.bf16 %v819
        %v822 = vld [vmem:[#allocation4] sm:$0xff]
        %v823 = vld [vmem:[#allocation4 + $0x8] sm:$0xff]
        %v824 = vmul.f32 %v820, %v822
        %v825 = vmul.f32 %v821, %v823
        %v826 = vpack.c.bf16 %v825, %v824
        %v827 = vld [vmem:[#allocation13] sm:$0xf]
        %v828 = vld [vmem:[#allocation13 + $0x4] sm:$0xf]
        %v829 = vld [vmem:[#allocation13 + $0x8] sm:$0xf]
        %v830 = vld [vmem:[#allocation13 + $0xc] sm:$0xf]
        %v835 = vunpack.c.l.b16 %v827
        %v836 = vunpack.c.l.b16 %v828
        %v837 = vunpack.c.l.b16 %v829
        %v838 = vunpack.c.l.b16 %v830
        %v839 = vpack.c.b16 %v836, %v835
        %v840 = vpack.c.b16 %v838, %v837
        %v844 = vsel %vm414, %v826, 0
        %846 = vmatprep.subr.bf16.mxu0 0
        %847 = vmatpush1.bf16.msra.mxu0 %v839
        %848 = vmatprep.subr.bf16.mxu0 0
        %849 = vmatpush1.bf16.msra.mxu0 %v840
        %850 = vmatprep.subr.bf16.mxu0 0
        %851 = vmatpush1.bf16.msra.mxu0 0
        %852 = vmatprep.subr.bf16.mxu0 0
        %853 = vmatpush1.bf16.msra.mxu0 0
        %854 = vmatprep.subr.bf16.mxu0 0
        %855 = vmatpush1.bf16.msra.mxu0 0
        %856 = vmatprep.subr.bf16.mxu0 0
        %857 = vmatpush1.bf16.msra.mxu0 0
        %858 = vmatprep.subr.bf16.mxu0 0
        %859 = vmatpush1.bf16.msra.mxu0 0
        %860 = vmatprep.subr.bf16.mxu0 0
        %861 = vmatpush1.bf16.msra.mxu0 0
        %862 = vmatprep.subr.bf16.mxu0 0
        %863 = vmatpush1.bf16.msra.mxu0 0
        %864 = vmatprep.subr.bf16.mxu0 0
        %865 = vmatpush1.bf16.msra.mxu0 0
        %866 = vmatprep.subr.bf16.mxu0 0
        %867 = vmatpush1.bf16.msra.mxu0 0
        %868 = vmatprep.subr.bf16.mxu0 0
        %869 = vmatpush1.bf16.msra.mxu0 0
        %870 = vmatprep.subr.bf16.mxu0 0
        %871 = vmatpush1.bf16.msra.mxu0 0
        %872 = vmatprep.subr.bf16.mxu0 0
        %873 = vmatpush1.bf16.msra.mxu0 0
        %874 = vmatprep.subr.bf16.mxu0 0
        %875 = vmatpush1.bf16.msra.mxu0 0
        %876 = vmatprep.subr.bf16.mxu0 0
        %877 = vmatpush1.bf16.msra.mxu0 0
        %878 = vmatprep.mubr.bf16.mxu0 0
        %879 = vmatmul.mubr.bf16.gmra.mrb[0].mxu0 %v844
        %v880 = vpop.f32.mrb[0].mxu0
        %v881 = vadd.f32 0.0, %v880
        %v882 = vpop.f32.mrb[0].mxu0
        %v883 = vpop.f32.mrb[0].mxu0
        %v884 = vadd.f32 0.0, %v883
        %v885 = vpop.f32.mrb[0].mxu0
        %886 = vdwg.mxu0
        %887 = vst.msk [vmem:[%s383] sm:$0xff] %vm414, %v881
        %888 = vst.msk [vmem:[%s383 + $0x8] sm:$0xff] %vm414, %v884
        %s889 = sand.u32 %s224, 1
        %s890 = scalar_lea.sflag [#allocation9], %s889
        %s891 = sand.u32 %s224, 1
        %s892 = smul.addr %s891, 16
        %s893 = scalar_lea.vmem [#allocation15], %s892
        // Predicated region
        $region73: #{hawk_forward.1} parent=51 // pred_check
          %p894 = pneg %p234
        $region74: #{hawk_forward.1} parent=51 // pred_check_branch
          %896 = sbr.rel (%p894) target = $region76
        $region75: #{hawk_forward.1} parent=51 // pred_region
          %s897 = smul.u32 2, %s32
          %s899 = ssub.s32 256, 256
          %900 = vsyncadd %s890, %s899
          %s901 = smul.addr %s31, 2
          %s902 = sadd.s32 %s897, %s901
          %s903 = smul.addr %s902, 128
          %s904 = scalar_lea.hbm %s8, %s903
          %s905 = sshll.u32 %s893, 4
          %s906 = int_to_ptr.vmem [resolvable:$true] %s905
          %911 = dma.vmem_to_hbm [thread:$0]  %s906, 256, %s904, %s890, 128, 128, 8
        $region76: #{hawk_forward.1} parent=51 // pred_fallthru
          _
      $region52: #{hawk_forward.1} parent=5 // pred_fallthru
        _
      %p912 = scmp.le.s32.totalorder 2, %s22
      // Predicated region
      $region77: #{hawk_forward.1} parent=5 // pred_check
        %p913 = pneg %p912
      $region78: #{hawk_forward.1} parent=5 // pred_check_branch
        %915 = sbr.rel (%p913) target = $region80
      $region79: #{hawk_forward.1} parent=5 // pred_region
        %s916 = ssub.s32 %s22, 2
        // Predicated region
        $region81: #{hawk_forward.1} parent=79 // pred_check
          %p917 = pneg %p240
        $region82: #{hawk_forward.1} parent=79 // pred_check_branch
          %919 = sbr.rel (%p917) target = $region84
        $region83: #{hawk_forward.1} parent=79 // pred_region
          %s920 = sand.u32 %s225, 1
          %s921 = scalar_lea.sflag [#allocation9], %s920
          %s922 = sand.u32 %s225, 1
          %s923 = smul.addr %s922, 16
          %s924 = scalar_lea.vmem [#allocation15], %s923
          %925 = dma.done %s921, 256
        $region84: #{hawk_forward.1} parent=79 // pred_fallthru
          _
      $region80: #{hawk_forward.1} parent=5 // pred_fallthru
        _
    $region6: #{hawk_forward.1} parent=1 // loop_footer
      %s26 = sadd.s32 1, %s22
    $region7: #{hawk_forward.1} parent=1 // loop_footer_branch
      %21 = sbr.rel target = $region3
    $region8: #{hawk_forward.1} parent=1 // loop_exit
      _
    %926 = vsyncpa [#allocation8], 1
    %s927 = scalar_lea.sflag [#allocation8], 1
    %928 = vsyncpa %s927, 1
    %929 = vsyncpa [#allocation11], 1
    %930 = vsyncpa [#allocation14], 1
    %931 = vsyncpa [#allocation9], 1
    %s932 = scalar_lea.sflag [#allocation9], 1
    %933 = vsyncpa %s932, 1

</llo_original>
